<compile_context>
chip_gen: v5e
topology: v5e:2x2
jax: 0.10.0
libtpu: 0.0.40
codegen_flags: <defaults>
</compile_context>

<pallas_src>
import jax
import jax.numpy as jnp
from jax.experimental import pallas as pl
from jax.experimental.pallas import tpu as pltpu

HIDDEN = 32      # coupling-net hidden width
NBINS = 30       # NonLinearLayer(input_dim, 30)
BOUND = 3.0      # support of the piecewise-linear bijection
ROW_ALIGN = 8    # sublane alignment for packed parameter sections
WPAD = 128       # lane-dense working width (pad lanes are exact pass-through)


# -----------------------------------------------------------------------------
# Host-side parameter packing
# -----------------------------------------------------------------------------
class _Packer:
    """Stacks (rows, width) float32 blocks into one array, 8-row aligned."""

    def __init__(self, width):
        self.width = width
        self.blocks = []
        self.off = 0

    def add(self, mat):
        mat = jnp.asarray(mat, jnp.float32)
        assert mat.ndim == 2 and mat.shape[1] == self.width
        off = self.off
        r = mat.shape[0]
        pad = (-r) % ROW_ALIGN
        if pad:
            mat = jnp.concatenate(
                [mat, jnp.zeros((pad, self.width), jnp.float32)], axis=0)
        self.blocks.append(mat)
        self.off += r + pad
        return off

    def finalize(self):
        return jnp.concatenate(self.blocks, axis=0)


def init_kr_net_packed(key, num_scales, num_cf, input_dim):
    """Deterministic init mirroring _KR_net.__init__, packed for the kernel."""
    D0 = input_dim
    assert D0 <= WPAD
    pa = _Packer(WPAD)          # D-lane-space rows (rotation, scale/bias, NL tables)
    pb = _Packer(HIDDEN)        # cond-projection weights / bias
    pc = _Packer(2 * WPAD)      # fused [s | t] output projections
    meta = {"D0": D0, "num_cf": num_cf, "scales": [], "nl": None}

    for s in range(num_scales - 1):               # non-last scales, outer -> inner
        D = D0 - s
        d1 = D // 2
        sc = {"D": D, "couplings": []}

        # RotationLayer: orthogonal W; reverse is x @ W^{-1} = x @ W.T.
        # Packed block-diag with identity on pad lanes so they pass through.
        key, k = jax.random.split(key)
        Q, _ = jnp.linalg.qr(jax.random.normal(k, (D, D), dtype=jnp.float32))
        w_inv = jnp.eye(WPAD, dtype=jnp.float32).at[:D, :D].set(Q.T)
        sc["winv_off"] = pa.add(w_inv)

        # ScaleBiasLayer reverse: (x - bias) * exp(-log_s).  exp precomputed;
        # pad lanes get scale=1 / bias=0 -> exact identity there.
        key, k1, k2 = jax.random.split(key, 3)
        log_s = 0.1 * jax.random.normal(k1, (num_cf, D), dtype=jnp.float32)
        bias = 0.1 * jax.random.normal(k2, (num_cf, D), dtype=jnp.float32)
        inv_scale = jnp.ones((num_cf, WPAD), jnp.float32).at[:, :D].set(jnp.exp(-log_s))
        bias_p = jnp.zeros((num_cf, WPAD), jnp.float32).at[:, :D].set(bias)
        sc["sbinv_off"] = pa.add(inv_scale)
        sc["sbbias_off"] = pa.add(bias_p)

        # AffineCouplingLayer (tanh MLP).  Weights zero-padded to full width so
        # the kernel never slices/concats oddly-aligned lanes; [ws | wt] fused.
        for i in range(num_cf):
            alternating = (i % 2 == 0)
            if alternating:
                c_lo, c_hi, t_lo, t_hi = 0, d1, d1, D
            else:
                c_lo, c_hi, t_lo, t_hi = d1, D, 0, d1
            d_cond, d_trans = c_hi - c_lo, t_hi - t_lo

            key, ka, kb = jax.random.split(key, 3)
            w1 = 0.1 * jax.random.normal(ka, (d_cond, HIDDEN), dtype=jnp.float32)
            b1 = jnp.zeros((1, HIDDEN), jnp.float32)
            w2 = 0.1 * jax.random.normal(kb, (HIDDEN, 2 * d_trans), dtype=jnp.float32)
            b2 = jnp.zeros((1, 2 * d_trans), jnp.float32)

            w1_p = jnp.zeros((WPAD, HIDDEN), jnp.float32).at[c_lo:c_hi, :].set(w1)
            wst_p = jnp.zeros((HIDDEN, 2 * WPAD), jnp.float32)
            wst_p = wst_p.at[:, t_lo:t_hi].set(w2[:, :d_trans])
            wst_p = wst_p.at[:, WPAD + t_lo:WPAD + t_hi].set(w2[:, d_trans:])
            bst_p = jnp.zeros((1, 2 * WPAD), jnp.float32)
            bst_p = bst_p.at[:, t_lo:t_hi].set(b2[:, :d_trans])
            bst_p = bst_p.at[:, WPAD + t_lo:WPAD + t_hi].set(b2[:, d_trans:])

            sc["couplings"].append({
                "trans_lo": t_lo, "trans_hi": t_hi,
                "w1_off": pb.add(w1_p), "b1_off": pb.add(b1),
                "wst_off": pc.add(wst_p), "bst_off": pc.add(bst_p),
            })
        meta["scales"].append(sc)

    # Last block: NonLinearLayer(D_last, 30) — per-dim monotone piecewise-linear
    # bijection on [-BOUND, BOUND), identity outside.  Bin tables precomputed.
    D_last = D0 - (num_scales - 1)
    key, k = jax.random.split(key)
    w = 0.1 * jax.random.normal(k, (D_last, NBINS), dtype=jnp.float32)
    heights = 2.0 * BOUND * jax.nn.softmax(w, axis=-1)                 # (D, NBINS)
    knot_y = jnp.concatenate(
        [jnp.zeros((D_last, 1), jnp.float32), jnp.cumsum(heights, axis=-1)],
        axis=-1) - BOUND                                               # (D, NBINS+1)
    knot_y = knot_y.at[:, -1].set(BOUND)       # clamp: bins cover exactly [-B, B)
    heights = jnp.maximum(knot_y[:, 1:] - knot_y[:, :-1], 1e-6)        # eps clamp
    bin_w = 2.0 * BOUND / NBINS
    kx_left = -BOUND + bin_w * jnp.arange(NBINS, dtype=jnp.float32)    # (NBINS,)
    inv_slope = bin_w / heights                                        # (D, NBINS)

    BIG = 1e30   # pad lanes never match a bin -> identity there
    left_t = jnp.full((NBINS, WPAD), BIG, jnp.float32).at[:, :D_last].set(knot_y[:, :NBINS].T)
    right_t = jnp.full((NBINS, WPAD), BIG, jnp.float32).at[:, :D_last].set(knot_y[:, 1:].T)
    kx_t = jnp.zeros((NBINS, WPAD), jnp.float32).at[:, :D_last].set(
        jnp.broadcast_to(kx_left[:, None], (NBINS, D_last)))
    isl_t = jnp.ones((NBINS, WPAD), jnp.float32).at[:, :D_last].set(inv_slope.T)

    meta["nl"] = {"D": D_last,
                  "left_off": pa.add(left_t), "right_off": pa.add(right_t),
                  "kx_off": pa.add(kx_t), "islope_off": pa.add(isl_t)}

    return pa.finalize(), pb.finalize(), pc.finalize(), meta


# -----------------------------------------------------------------------------
# Fused kernel: whole reverse pass (all scales) in one pallas_call.
# -----------------------------------------------------------------------------
def _make_fused_kernel(B, meta):
    D0 = meta["D0"]
    num_cf = meta["num_cf"]
    nl = meta["nl"]

    def row(ref, off):                       # static single-row read -> (1, width)
        return ref[pl.ds(off, 1), :]

    def kernel(x_ref, pa_ref, pb_ref, pc_ref, out_ref):
        x = x_ref[...]                                               # (B, WPAD) f32
        lanes = jax.lax.broadcasted_iota(jnp.int32, (B, WPAD), 1)    # hoisted iota

        # ---- innermost (last) block: NonLinearLayer reverse on lanes < D_last.
        # Bins are disjoint -> independent deltas, pairwise tree sum (no 30-deep
        # serial select chain).  All 2-D, pure VALU.
        deltas = []
        for b in range(NBINS):
            left = row(pa_ref, nl["left_off"] + b)
            right = row(pa_ref, nl["right_off"] + b)
            kx = row(pa_ref, nl["kx_off"] + b)
            isl = row(pa_ref, nl["islope_off"] + b)
            in_bin = jnp.logical_and(x >= left, x < right)
            deltas.append(jnp.where(in_bin, kx + (x - left) * isl - x, 0.0))
        while len(deltas) > 1:
            nxt = [deltas[i] + deltas[i + 1] for i in range(0, len(deltas) - 1, 2)]
            if len(deltas) % 2:
                nxt.append(deltas[-1])
            deltas = nxt
        x = x + deltas[0]

        # ---- unwind scales: innermost non-last -> outermost ------------------
        for sc in reversed(meta["scales"]):
            D = sc["D"]
            n = D - 1

            # _transform_x_split reverse: x_split <- std(x_main)*x_split + mean
            if n > 1:
                main_mask = lanes < n
                xm = jnp.where(main_mask, x, 0.0)
                mean = jnp.sum(xm, axis=1, keepdims=True) / n
                diff = jnp.where(main_mask, x - mean, 0.0)
                var = jnp.sum(diff * diff, axis=1, keepdims=True) / (n - 1)
                std = jnp.sqrt(var)                              # torch.std (ddof=1)
                x = jnp.where(lanes == n, std * x + mean, x)
            # n == 1: PyTorch sets mean=0, std=1 -> identity, nothing to do.

            for i in reversed(range(num_cf)):
                cp = sc["couplings"][i]

                # cond projection as ONE MXU dot (w1 is zero outside cond rows)
                w1 = pb_ref[pl.ds(cp["w1_off"], WPAD), :]        # (WPAD, HIDDEN)
                h = jnp.tanh(jnp.dot(x, w1, preferred_element_type=jnp.float32)
                             + row(pb_ref, cp["b1_off"]))

                # fused hidden -> [s | t] as ONE MXU dot; 128-aligned lane split
                wst = pc_ref[pl.ds(cp["wst_off"], HIDDEN), :]    # (HIDDEN, 2*WPAD)
                st = (jnp.dot(h, wst, preferred_element_type=jnp.float32)
                      + row(pc_ref, cp["bst_off"]))              # (B, 2*WPAD)
                s = jnp.tanh(st[:, :WPAD])
                t = st[:, WPAD:]

                # affine coupling reverse on the trans lanes (iota-mask merge)
                trans_mask = jnp.logical_and(lanes >= cp["trans_lo"],
                                             lanes < cp["trans_hi"])
                x = jnp.where(trans_mask, (x - t) * jnp.exp(-s), x)

                # ScaleBiasLayer reverse: (x - bias) * exp(-log_s); identity on
                # pad lanes by construction (scale=1, bias=0).
                x = (x - row(pa_ref, sc["sbbias_off"] + i)) \
                    * row(pa_ref, sc["sbinv_off"] + i)

            # RotationLayer reverse as ONE MXU dot against the block-diag packed
            # inverse (identity on pad lanes -> pass-through).
            winv = pa_ref[pl.ds(sc["winv_off"], WPAD), :]        # (WPAD, WPAD)
            x = jnp.dot(x, winv, preferred_element_type=jnp.float32)

        out_ref[...] = x                                         # lane-dense store

    return kernel


def kr_net_forward(x, packA, packB, packC, meta, pdj=None, sldj=None, reverse=True):
    if not reverse:
        # TODO(synk): reverse=False (density / Jacobian) direction not implemented.
        raise NotImplementedError("only reverse=True is implemented")
    B, D0 = x.shape
    assert D0 == meta["D0"]
    # Lane-dense padding (layout plumbing only; pad lanes are exact pass-through).
    x_pad = jnp.zeros((B, WPAD), jnp.float32).at[:, :D0].set(x.astype(jnp.float32))
    kernel = _make_fused_kernel(B, meta)
    out_pad = pl.pallas_call(
        kernel,
        out_shape=jax.ShapeDtypeStruct((B, WPAD), jnp.float32),
        in_specs=[pl.BlockSpec(memory_space=pltpu.MemorySpace.VMEM)] * 4,
        out_specs=pl.BlockSpec(memory_space=pltpu.MemorySpace.VMEM),
        compiler_params=pltpu.CompilerParams(vmem_limit_bytes=32 * 1024 * 1024),
    )(x_pad, packA, packB, packC)
    return out_pad[:, :D0], pdj, sldj


# -----------------------------------------------------------------------------
# Pure-JAX reference (same math, no Pallas) used to validate the lowering.
# -----------------------------------------------------------------------------
def kr_net_reference(x, packA, packB, packC, meta):
    HI = jax.lax.Precision.HIGHEST
    B, D0 = x.shape
    xw = jnp.zeros((B, WPAD), jnp.float32).at[:, :D0].set(x)
    lanes = jnp.arange(WPAD)[None, :]
    nl = meta["nl"]
    acc = xw
    for b in range(NBINS):
        left = packA[nl["left_off"] + b][None, :]
        right = packA[nl["right_off"] + b][None, :]
        kx = packA[nl["kx_off"] + b][None, :]
        isl = packA[nl["islope_off"] + b][None, :]
        acc = jnp.where((xw >= left) & (xw < right), kx + (xw - left) * isl, acc)
    xw = acc
    for sc in reversed(meta["scales"]):
        D = sc["D"]
        n = D - 1
        if n > 1:
            mm = lanes < n
            xm = jnp.where(mm, xw, 0.0)
            mean = jnp.sum(xm, axis=1, keepdims=True) / n
            diff = jnp.where(mm, xw - mean, 0.0)
            std = jnp.sqrt(jnp.sum(diff * diff, axis=1, keepdims=True) / (n - 1))
            xw = jnp.where(lanes == n, std * xw + mean, xw)
        for i in reversed(range(meta["num_cf"])):
            cp = sc["couplings"][i]
            w1 = packB[cp["w1_off"]:cp["w1_off"] + WPAD]
            h = jnp.tanh(jnp.dot(xw, w1, precision=HI) + packB[cp["b1_off"]][None, :])
            wst = packC[cp["wst_off"]:cp["wst_off"] + HIDDEN]
            st = jnp.dot(h, wst, precision=HI) + packC[cp["bst_off"]][None, :]
            s = jnp.tanh(st[:, :WPAD])
            t = st[:, WPAD:]
            tm = (lanes >= cp["trans_lo"]) & (lanes < cp["trans_hi"])
            xw = jnp.where(tm, (xw - t) * jnp.exp(-s), xw)
            xw = (xw - packA[sc["sbbias_off"] + i][None, :]) * packA[sc["sbinv_off"] + i][None, :]
        winv = packA[sc["winv_off"]:sc["winv_off"] + WPAD]
        xw = jnp.dot(xw, winv, precision=HI)
    return xw[:, :D0]


if __name__ == "__main__":
    B = 8
    INPUT_DIM = 6
    NUM_SCALES = 3
    NUM_CF = 2

    x = jax.random.normal(jax.random.PRNGKey(0), (B, INPUT_DIM), dtype=jnp.float32)
    packA, packB, packC, meta = init_kr_net_packed(jax.random.PRNGKey(42),
                                                   NUM_SCALES, NUM_CF, INPUT_DIM)

    out, pdj, sldj = kr_net_forward(x, packA, packB, packC, meta,
                                    pdj=None, sldj=None, reverse=True)
    out = jax.block_until_ready(out)
    assert out.shape == (B, INPUT_DIM) and out.dtype == jnp.float32
    assert bool(jnp.all(jnp.isfinite(out)))

    ref = jax.block_until_ready(kr_net_reference(x, packA, packB, packC, meta))
    assert bool(jnp.allclose(out, ref, atol=5e-3, rtol=5e-3)), \
        f"mismatch: max abs diff = {float(jnp.max(jnp.abs(out - ref)))}"

    print("KERNEL_OK")
</pallas_src>

<mosaic_0001>
module attributes {stable_mosaic.version = 11 : i64} {
  func.func @kernel(%arg0: memref<8x128xf32, #tpu.memory_space<vmem>>, %arg1: memref<416x128xf32, #tpu.memory_space<vmem>>, %arg2: memref<544x32xf32, #tpu.memory_space<vmem>>, %arg3: memref<160x256xf32, #tpu.memory_space<vmem>>, %arg4: memref<8x128xf32, #tpu.memory_space<vmem>>) attributes {dimension_semantics = [], scalar_prefetch = 0 : i64, scratch_operands = 0 : i64, tpu.core_type = #tpu.core_type<tc>} {
    %c0 = arith.constant 0 : index
    %c0_0 = arith.constant 0 : index
    %0 = vector.load %arg0[%c0, %c0_0] : memref<8x128xf32, #tpu.memory_space<vmem>>, vector<8x128xf32>
    %1 = tpu.iota {dimensions = array<i32: 1>} : vector<8x128xi32>
    %c288 = arith.constant 288 : index
    %c0_1 = arith.constant 0 : index
    %2 = vector.load %arg1[%c288, %c0_1] : memref<416x128xf32, #tpu.memory_space<vmem>>, vector<1x128xf32>
    %c320 = arith.constant 320 : index
    %c0_2 = arith.constant 0 : index
    %3 = vector.load %arg1[%c320, %c0_2] : memref<416x128xf32, #tpu.memory_space<vmem>>, vector<1x128xf32>
    %c352 = arith.constant 352 : index
    %c0_3 = arith.constant 0 : index
    %4 = vector.load %arg1[%c352, %c0_3] : memref<416x128xf32, #tpu.memory_space<vmem>>, vector<1x128xf32>
    %c384 = arith.constant 384 : index
    %c0_4 = arith.constant 0 : index
    %5 = vector.load %arg1[%c384, %c0_4] : memref<416x128xf32, #tpu.memory_space<vmem>>, vector<1x128xf32>
    %6 = vector.broadcast %2 : vector<1x128xf32> to vector<8x128xf32>
    %7 = arith.cmpf oge, %0, %6 : vector<8x128xf32>
    %8 = vector.broadcast %3 : vector<1x128xf32> to vector<8x128xf32>
    %9 = arith.cmpf olt, %0, %8 : vector<8x128xf32>
    %10 = arith.andi %7, %9 : vector<8x128xi1>
    %11 = vector.broadcast %2 : vector<1x128xf32> to vector<8x128xf32>
    %12 = arith.subf %0, %11 : vector<8x128xf32>
    %13 = vector.broadcast %5 : vector<1x128xf32> to vector<8x128xf32>
    %14 = arith.mulf %12, %13 : vector<8x128xf32>
    %15 = vector.broadcast %4 : vector<1x128xf32> to vector<8x128xf32>
    %16 = arith.addf %15, %14 : vector<8x128xf32>
    %17 = arith.subf %16, %0 : vector<8x128xf32>
    %cst = arith.constant 0.000000e+00 : f32
    %18 = vector.broadcast %cst : f32 to vector<8x128xf32>
    %19 = arith.select %10, %17, %18 : vector<8x128xi1>, vector<8x128xf32>
    %c289 = arith.constant 289 : index
    %c0_5 = arith.constant 0 : index
    %20 = vector.load %arg1[%c289, %c0_5] : memref<416x128xf32, #tpu.memory_space<vmem>>, vector<1x128xf32>
    %c321 = arith.constant 321 : index
    %c0_6 = arith.constant 0 : index
    %21 = vector.load %arg1[%c321, %c0_6] : memref<416x128xf32, #tpu.memory_space<vmem>>, vector<1x128xf32>
    %c353 = arith.constant 353 : index
    %c0_7 = arith.constant 0 : index
    %22 = vector.load %arg1[%c353, %c0_7] : memref<416x128xf32, #tpu.memory_space<vmem>>, vector<1x128xf32>
    %c385 = arith.constant 385 : index
    %c0_8 = arith.constant 0 : index
    %23 = vector.load %arg1[%c385, %c0_8] : memref<416x128xf32, #tpu.memory_space<vmem>>, vector<1x128xf32>
    %24 = vector.broadcast %20 : vector<1x128xf32> to vector<8x128xf32>
    %25 = arith.cmpf oge, %0, %24 : vector<8x128xf32>
    %26 = vector.broadcast %21 : vector<1x128xf32> to vector<8x128xf32>
    %27 = arith.cmpf olt, %0, %26 : vector<8x128xf32>
    %28 = arith.andi %25, %27 : vector<8x128xi1>
    %29 = vector.broadcast %20 : vector<1x128xf32> to vector<8x128xf32>
    %30 = arith.subf %0, %29 : vector<8x128xf32>
    %31 = vector.broadcast %23 : vector<1x128xf32> to vector<8x128xf32>
    %32 = arith.mulf %30, %31 : vector<8x128xf32>
    %33 = vector.broadcast %22 : vector<1x128xf32> to vector<8x128xf32>
    %34 = arith.addf %33, %32 : vector<8x128xf32>
    %35 = arith.subf %34, %0 : vector<8x128xf32>
    %cst_9 = arith.constant 0.000000e+00 : f32
    %36 = vector.broadcast %cst_9 : f32 to vector<8x128xf32>
    %37 = arith.select %28, %35, %36 : vector<8x128xi1>, vector<8x128xf32>
    %c290 = arith.constant 290 : index
    %c0_10 = arith.constant 0 : index
    %38 = vector.load %arg1[%c290, %c0_10] : memref<416x128xf32, #tpu.memory_space<vmem>>, vector<1x128xf32>
    %c322 = arith.constant 322 : index
    %c0_11 = arith.constant 0 : index
    %39 = vector.load %arg1[%c322, %c0_11] : memref<416x128xf32, #tpu.memory_space<vmem>>, vector<1x128xf32>
    %c354 = arith.constant 354 : index
    %c0_12 = arith.constant 0 : index
    %40 = vector.load %arg1[%c354, %c0_12] : memref<416x128xf32, #tpu.memory_space<vmem>>, vector<1x128xf32>
    %c386 = arith.constant 386 : index
    %c0_13 = arith.constant 0 : index
    %41 = vector.load %arg1[%c386, %c0_13] : memref<416x128xf32, #tpu.memory_space<vmem>>, vector<1x128xf32>
    %42 = vector.broadcast %38 : vector<1x128xf32> to vector<8x128xf32>
    %43 = arith.cmpf oge, %0, %42 : vector<8x128xf32>
    %44 = vector.broadcast %39 : vector<1x128xf32> to vector<8x128xf32>
    %45 = arith.cmpf olt, %0, %44 : vector<8x128xf32>
    %46 = arith.andi %43, %45 : vector<8x128xi1>
    %47 = vector.broadcast %38 : vector<1x128xf32> to vector<8x128xf32>
    %48 = arith.subf %0, %47 : vector<8x128xf32>
    %49 = vector.broadcast %41 : vector<1x128xf32> to vector<8x128xf32>
    %50 = arith.mulf %48, %49 : vector<8x128xf32>
    %51 = vector.broadcast %40 : vector<1x128xf32> to vector<8x128xf32>
    %52 = arith.addf %51, %50 : vector<8x128xf32>
    %53 = arith.subf %52, %0 : vector<8x128xf32>
    %cst_14 = arith.constant 0.000000e+00 : f32
    %54 = vector.broadcast %cst_14 : f32 to vector<8x128xf32>
    %55 = arith.select %46, %53, %54 : vector<8x128xi1>, vector<8x128xf32>
    %c291 = arith.constant 291 : index
    %c0_15 = arith.constant 0 : index
    %56 = vector.load %arg1[%c291, %c0_15] : memref<416x128xf32, #tpu.memory_space<vmem>>, vector<1x128xf32>
    %c323 = arith.constant 323 : index
    %c0_16 = arith.constant 0 : index
    %57 = vector.load %arg1[%c323, %c0_16] : memref<416x128xf32, #tpu.memory_space<vmem>>, vector<1x128xf32>
    %c355 = arith.constant 355 : index
    %c0_17 = arith.constant 0 : index
    %58 = vector.load %arg1[%c355, %c0_17] : memref<416x128xf32, #tpu.memory_space<vmem>>, vector<1x128xf32>
    %c387 = arith.constant 387 : index
    %c0_18 = arith.constant 0 : index
    %59 = vector.load %arg1[%c387, %c0_18] : memref<416x128xf32, #tpu.memory_space<vmem>>, vector<1x128xf32>
    %60 = vector.broadcast %56 : vector<1x128xf32> to vector<8x128xf32>
    %61 = arith.cmpf oge, %0, %60 : vector<8x128xf32>
    %62 = vector.broadcast %57 : vector<1x128xf32> to vector<8x128xf32>
    %63 = arith.cmpf olt, %0, %62 : vector<8x128xf32>
    %64 = arith.andi %61, %63 : vector<8x128xi1>
    %65 = vector.broadcast %56 : vector<1x128xf32> to vector<8x128xf32>
    %66 = arith.subf %0, %65 : vector<8x128xf32>
    %67 = vector.broadcast %59 : vector<1x128xf32> to vector<8x128xf32>
    %68 = arith.mulf %66, %67 : vector<8x128xf32>
    %69 = vector.broadcast %58 : vector<1x128xf32> to vector<8x128xf32>
    %70 = arith.addf %69, %68 : vector<8x128xf32>
    %71 = arith.subf %70, %0 : vector<8x128xf32>
    %cst_19 = arith.constant 0.000000e+00 : f32
    %72 = vector.broadcast %cst_19 : f32 to vector<8x128xf32>
    %73 = arith.select %64, %71, %72 : vector<8x128xi1>, vector<8x128xf32>
    %c292 = arith.constant 292 : index
    %c0_20 = arith.constant 0 : index
    %74 = vector.load %arg1[%c292, %c0_20] : memref<416x128xf32, #tpu.memory_space<vmem>>, vector<1x128xf32>
    %c324 = arith.constant 324 : index
    %c0_21 = arith.constant 0 : index
    %75 = vector.load %arg1[%c324, %c0_21] : memref<416x128xf32, #tpu.memory_space<vmem>>, vector<1x128xf32>
    %c356 = arith.constant 356 : index
    %c0_22 = arith.constant 0 : index
    %76 = vector.load %arg1[%c356, %c0_22] : memref<416x128xf32, #tpu.memory_space<vmem>>, vector<1x128xf32>
    %c388 = arith.constant 388 : index
    %c0_23 = arith.constant 0 : index
    %77 = vector.load %arg1[%c388, %c0_23] : memref<416x128xf32, #tpu.memory_space<vmem>>, vector<1x128xf32>
    %78 = vector.broadcast %74 : vector<1x128xf32> to vector<8x128xf32>
    %79 = arith.cmpf oge, %0, %78 : vector<8x128xf32>
    %80 = vector.broadcast %75 : vector<1x128xf32> to vector<8x128xf32>
    %81 = arith.cmpf olt, %0, %80 : vector<8x128xf32>
    %82 = arith.andi %79, %81 : vector<8x128xi1>
    %83 = vector.broadcast %74 : vector<1x128xf32> to vector<8x128xf32>
    %84 = arith.subf %0, %83 : vector<8x128xf32>
    %85 = vector.broadcast %77 : vector<1x128xf32> to vector<8x128xf32>
    %86 = arith.mulf %84, %85 : vector<8x128xf32>
    %87 = vector.broadcast %76 : vector<1x128xf32> to vector<8x128xf32>
    %88 = arith.addf %87, %86 : vector<8x128xf32>
    %89 = arith.subf %88, %0 : vector<8x128xf32>
    %cst_24 = arith.constant 0.000000e+00 : f32
    %90 = vector.broadcast %cst_24 : f32 to vector<8x128xf32>
    %91 = arith.select %82, %89, %90 : vector<8x128xi1>, vector<8x128xf32>
    %c293 = arith.constant 293 : index
    %c0_25 = arith.constant 0 : index
    %92 = vector.load %arg1[%c293, %c0_25] : memref<416x128xf32, #tpu.memory_space<vmem>>, vector<1x128xf32>
    %c325 = arith.constant 325 : index
    %c0_26 = arith.constant 0 : index
    %93 = vector.load %arg1[%c325, %c0_26] : memref<416x128xf32, #tpu.memory_space<vmem>>, vector<1x128xf32>
    %c357 = arith.constant 357 : index
    %c0_27 = arith.constant 0 : index
    %94 = vector.load %arg1[%c357, %c0_27] : memref<416x128xf32, #tpu.memory_space<vmem>>, vector<1x128xf32>
    %c389 = arith.constant 389 : index
    %c0_28 = arith.constant 0 : index
    %95 = vector.load %arg1[%c389, %c0_28] : memref<416x128xf32, #tpu.memory_space<vmem>>, vector<1x128xf32>
    %96 = vector.broadcast %92 : vector<1x128xf32> to vector<8x128xf32>
    %97 = arith.cmpf oge, %0, %96 : vector<8x128xf32>
    %98 = vector.broadcast %93 : vector<1x128xf32> to vector<8x128xf32>
    %99 = arith.cmpf olt, %0, %98 : vector<8x128xf32>
    %100 = arith.andi %97, %99 : vector<8x128xi1>
    %101 = vector.broadcast %92 : vector<1x128xf32> to vector<8x128xf32>
    %102 = arith.subf %0, %101 : vector<8x128xf32>
    %103 = vector.broadcast %95 : vector<1x128xf32> to vector<8x128xf32>
    %104 = arith.mulf %102, %103 : vector<8x128xf32>
    %105 = vector.broadcast %94 : vector<1x128xf32> to vector<8x128xf32>
    %106 = arith.addf %105, %104 : vector<8x128xf32>
    %107 = arith.subf %106, %0 : vector<8x128xf32>
    %cst_29 = arith.constant 0.000000e+00 : f32
    %108 = vector.broadcast %cst_29 : f32 to vector<8x128xf32>
    %109 = arith.select %100, %107, %108 : vector<8x128xi1>, vector<8x128xf32>
    %c294 = arith.constant 294 : index
    %c0_30 = arith.constant 0 : index
    %110 = vector.load %arg1[%c294, %c0_30] : memref<416x128xf32, #tpu.memory_space<vmem>>, vector<1x128xf32>
    %c326 = arith.constant 326 : index
    %c0_31 = arith.constant 0 : index
    %111 = vector.load %arg1[%c326, %c0_31] : memref<416x128xf32, #tpu.memory_space<vmem>>, vector<1x128xf32>
    %c358 = arith.constant 358 : index
    %c0_32 = arith.constant 0 : index
    %112 = vector.load %arg1[%c358, %c0_32] : memref<416x128xf32, #tpu.memory_space<vmem>>, vector<1x128xf32>
    %c390 = arith.constant 390 : index
    %c0_33 = arith.constant 0 : index
    %113 = vector.load %arg1[%c390, %c0_33] : memref<416x128xf32, #tpu.memory_space<vmem>>, vector<1x128xf32>
    %114 = vector.broadcast %110 : vector<1x128xf32> to vector<8x128xf32>
    %115 = arith.cmpf oge, %0, %114 : vector<8x128xf32>
    %116 = vector.broadcast %111 : vector<1x128xf32> to vector<8x128xf32>
    %117 = arith.cmpf olt, %0, %116 : vector<8x128xf32>
    %118 = arith.andi %115, %117 : vector<8x128xi1>
    %119 = vector.broadcast %110 : vector<1x128xf32> to vector<8x128xf32>
    %120 = arith.subf %0, %119 : vector<8x128xf32>
    %121 = vector.broadcast %113 : vector<1x128xf32> to vector<8x128xf32>
    %122 = arith.mulf %120, %121 : vector<8x128xf32>
    %123 = vector.broadcast %112 : vector<1x128xf32> to vector<8x128xf32>
    %124 = arith.addf %123, %122 : vector<8x128xf32>
    %125 = arith.subf %124, %0 : vector<8x128xf32>
    %cst_34 = arith.constant 0.000000e+00 : f32
    %126 = vector.broadcast %cst_34 : f32 to vector<8x128xf32>
    %127 = arith.select %118, %125, %126 : vector<8x128xi1>, vector<8x128xf32>
    %c295 = arith.constant 295 : index
    %c0_35 = arith.constant 0 : index
    %128 = vector.load %arg1[%c295, %c0_35] : memref<416x128xf32, #tpu.memory_space<vmem>>, vector<1x128xf32>
    %c327 = arith.constant 327 : index
    %c0_36 = arith.constant 0 : index
    %129 = vector.load %arg1[%c327, %c0_36] : memref<416x128xf32, #tpu.memory_space<vmem>>, vector<1x128xf32>
    %c359 = arith.constant 359 : index
    %c0_37 = arith.constant 0 : index
    %130 = vector.load %arg1[%c359, %c0_37] : memref<416x128xf32, #tpu.memory_space<vmem>>, vector<1x128xf32>
    %c391 = arith.constant 391 : index
    %c0_38 = arith.constant 0 : index
    %131 = vector.load %arg1[%c391, %c0_38] : memref<416x128xf32, #tpu.memory_space<vmem>>, vector<1x128xf32>
    %132 = vector.broadcast %128 : vector<1x128xf32> to vector<8x128xf32>
    %133 = arith.cmpf oge, %0, %132 : vector<8x128xf32>
    %134 = vector.broadcast %129 : vector<1x128xf32> to vector<8x128xf32>
    %135 = arith.cmpf olt, %0, %134 : vector<8x128xf32>
    %136 = arith.andi %133, %135 : vector<8x128xi1>
    %137 = vector.broadcast %128 : vector<1x128xf32> to vector<8x128xf32>
    %138 = arith.subf %0, %137 : vector<8x128xf32>
    %139 = vector.broadcast %131 : vector<1x128xf32> to vector<8x128xf32>
    %140 = arith.mulf %138, %139 : vector<8x128xf32>
    %141 = vector.broadcast %130 : vector<1x128xf32> to vector<8x128xf32>
    %142 = arith.addf %141, %140 : vector<8x128xf32>
    %143 = arith.subf %142, %0 : vector<8x128xf32>
    %cst_39 = arith.constant 0.000000e+00 : f32
    %144 = vector.broadcast %cst_39 : f32 to vector<8x128xf32>
    %145 = arith.select %136, %143, %144 : vector<8x128xi1>, vector<8x128xf32>
    %c296 = arith.constant 296 : index
    %c0_40 = arith.constant 0 : index
    %146 = vector.load %arg1[%c296, %c0_40] : memref<416x128xf32, #tpu.memory_space<vmem>>, vector<1x128xf32>
    %c328 = arith.constant 328 : index
    %c0_41 = arith.constant 0 : index
    %147 = vector.load %arg1[%c328, %c0_41] : memref<416x128xf32, #tpu.memory_space<vmem>>, vector<1x128xf32>
    %c360 = arith.constant 360 : index
    %c0_42 = arith.constant 0 : index
    %148 = vector.load %arg1[%c360, %c0_42] : memref<416x128xf32, #tpu.memory_space<vmem>>, vector<1x128xf32>
    %c392 = arith.constant 392 : index
    %c0_43 = arith.constant 0 : index
    %149 = vector.load %arg1[%c392, %c0_43] : memref<416x128xf32, #tpu.memory_space<vmem>>, vector<1x128xf32>
    %150 = vector.broadcast %146 : vector<1x128xf32> to vector<8x128xf32>
    %151 = arith.cmpf oge, %0, %150 : vector<8x128xf32>
    %152 = vector.broadcast %147 : vector<1x128xf32> to vector<8x128xf32>
    %153 = arith.cmpf olt, %0, %152 : vector<8x128xf32>
    %154 = arith.andi %151, %153 : vector<8x128xi1>
    %155 = vector.broadcast %146 : vector<1x128xf32> to vector<8x128xf32>
    %156 = arith.subf %0, %155 : vector<8x128xf32>
    %157 = vector.broadcast %149 : vector<1x128xf32> to vector<8x128xf32>
    %158 = arith.mulf %156, %157 : vector<8x128xf32>
    %159 = vector.broadcast %148 : vector<1x128xf32> to vector<8x128xf32>
    %160 = arith.addf %159, %158 : vector<8x128xf32>
    %161 = arith.subf %160, %0 : vector<8x128xf32>
    %cst_44 = arith.constant 0.000000e+00 : f32
    %162 = vector.broadcast %cst_44 : f32 to vector<8x128xf32>
    %163 = arith.select %154, %161, %162 : vector<8x128xi1>, vector<8x128xf32>
    %c297 = arith.constant 297 : index
    %c0_45 = arith.constant 0 : index
    %164 = vector.load %arg1[%c297, %c0_45] : memref<416x128xf32, #tpu.memory_space<vmem>>, vector<1x128xf32>
    %c329 = arith.constant 329 : index
    %c0_46 = arith.constant 0 : index
    %165 = vector.load %arg1[%c329, %c0_46] : memref<416x128xf32, #tpu.memory_space<vmem>>, vector<1x128xf32>
    %c361 = arith.constant 361 : index
    %c0_47 = arith.constant 0 : index
    %166 = vector.load %arg1[%c361, %c0_47] : memref<416x128xf32, #tpu.memory_space<vmem>>, vector<1x128xf32>
    %c393 = arith.constant 393 : index
    %c0_48 = arith.constant 0 : index
    %167 = vector.load %arg1[%c393, %c0_48] : memref<416x128xf32, #tpu.memory_space<vmem>>, vector<1x128xf32>
    %168 = vector.broadcast %164 : vector<1x128xf32> to vector<8x128xf32>
    %169 = arith.cmpf oge, %0, %168 : vector<8x128xf32>
    %170 = vector.broadcast %165 : vector<1x128xf32> to vector<8x128xf32>
    %171 = arith.cmpf olt, %0, %170 : vector<8x128xf32>
    %172 = arith.andi %169, %171 : vector<8x128xi1>
    %173 = vector.broadcast %164 : vector<1x128xf32> to vector<8x128xf32>
    %174 = arith.subf %0, %173 : vector<8x128xf32>
    %175 = vector.broadcast %167 : vector<1x128xf32> to vector<8x128xf32>
    %176 = arith.mulf %174, %175 : vector<8x128xf32>
    %177 = vector.broadcast %166 : vector<1x128xf32> to vector<8x128xf32>
    %178 = arith.addf %177, %176 : vector<8x128xf32>
    %179 = arith.subf %178, %0 : vector<8x128xf32>
    %cst_49 = arith.constant 0.000000e+00 : f32
    %180 = vector.broadcast %cst_49 : f32 to vector<8x128xf32>
    %181 = arith.select %172, %179, %180 : vector<8x128xi1>, vector<8x128xf32>
    %c298 = arith.constant 298 : index
    %c0_50 = arith.constant 0 : index
    %182 = vector.load %arg1[%c298, %c0_50] : memref<416x128xf32, #tpu.memory_space<vmem>>, vector<1x128xf32>
    %c330 = arith.constant 330 : index
    %c0_51 = arith.constant 0 : index
    %183 = vector.load %arg1[%c330, %c0_51] : memref<416x128xf32, #tpu.memory_space<vmem>>, vector<1x128xf32>
    %c362 = arith.constant 362 : index
    %c0_52 = arith.constant 0 : index
    %184 = vector.load %arg1[%c362, %c0_52] : memref<416x128xf32, #tpu.memory_space<vmem>>, vector<1x128xf32>
    %c394 = arith.constant 394 : index
    %c0_53 = arith.constant 0 : index
    %185 = vector.load %arg1[%c394, %c0_53] : memref<416x128xf32, #tpu.memory_space<vmem>>, vector<1x128xf32>
    %186 = vector.broadcast %182 : vector<1x128xf32> to vector<8x128xf32>
    %187 = arith.cmpf oge, %0, %186 : vector<8x128xf32>
    %188 = vector.broadcast %183 : vector<1x128xf32> to vector<8x128xf32>
    %189 = arith.cmpf olt, %0, %188 : vector<8x128xf32>
    %190 = arith.andi %187, %189 : vector<8x128xi1>
    %191 = vector.broadcast %182 : vector<1x128xf32> to vector<8x128xf32>
    %192 = arith.subf %0, %191 : vector<8x128xf32>
    %193 = vector.broadcast %185 : vector<1x128xf32> to vector<8x128xf32>
    %194 = arith.mulf %192, %193 : vector<8x128xf32>
    %195 = vector.broadcast %184 : vector<1x128xf32> to vector<8x128xf32>
    %196 = arith.addf %195, %194 : vector<8x128xf32>
    %197 = arith.subf %196, %0 : vector<8x128xf32>
    %cst_54 = arith.constant 0.000000e+00 : f32
    %198 = vector.broadcast %cst_54 : f32 to vector<8x128xf32>
    %199 = arith.select %190, %197, %198 : vector<8x128xi1>, vector<8x128xf32>
    %c299 = arith.constant 299 : index
    %c0_55 = arith.constant 0 : index
    %200 = vector.load %arg1[%c299, %c0_55] : memref<416x128xf32, #tpu.memory_space<vmem>>, vector<1x128xf32>
    %c331 = arith.constant 331 : index
    %c0_56 = arith.constant 0 : index
    %201 = vector.load %arg1[%c331, %c0_56] : memref<416x128xf32, #tpu.memory_space<vmem>>, vector<1x128xf32>
    %c363 = arith.constant 363 : index
    %c0_57 = arith.constant 0 : index
    %202 = vector.load %arg1[%c363, %c0_57] : memref<416x128xf32, #tpu.memory_space<vmem>>, vector<1x128xf32>
    %c395 = arith.constant 395 : index
    %c0_58 = arith.constant 0 : index
    %203 = vector.load %arg1[%c395, %c0_58] : memref<416x128xf32, #tpu.memory_space<vmem>>, vector<1x128xf32>
    %204 = vector.broadcast %200 : vector<1x128xf32> to vector<8x128xf32>
    %205 = arith.cmpf oge, %0, %204 : vector<8x128xf32>
    %206 = vector.broadcast %201 : vector<1x128xf32> to vector<8x128xf32>
    %207 = arith.cmpf olt, %0, %206 : vector<8x128xf32>
    %208 = arith.andi %205, %207 : vector<8x128xi1>
    %209 = vector.broadcast %200 : vector<1x128xf32> to vector<8x128xf32>
    %210 = arith.subf %0, %209 : vector<8x128xf32>
    %211 = vector.broadcast %203 : vector<1x128xf32> to vector<8x128xf32>
    %212 = arith.mulf %210, %211 : vector<8x128xf32>
    %213 = vector.broadcast %202 : vector<1x128xf32> to vector<8x128xf32>
    %214 = arith.addf %213, %212 : vector<8x128xf32>
    %215 = arith.subf %214, %0 : vector<8x128xf32>
    %cst_59 = arith.constant 0.000000e+00 : f32
    %216 = vector.broadcast %cst_59 : f32 to vector<8x128xf32>
    %217 = arith.select %208, %215, %216 : vector<8x128xi1>, vector<8x128xf32>
    %c300 = arith.constant 300 : index
    %c0_60 = arith.constant 0 : index
    %218 = vector.load %arg1[%c300, %c0_60] : memref<416x128xf32, #tpu.memory_space<vmem>>, vector<1x128xf32>
    %c332 = arith.constant 332 : index
    %c0_61 = arith.constant 0 : index
    %219 = vector.load %arg1[%c332, %c0_61] : memref<416x128xf32, #tpu.memory_space<vmem>>, vector<1x128xf32>
    %c364 = arith.constant 364 : index
    %c0_62 = arith.constant 0 : index
    %220 = vector.load %arg1[%c364, %c0_62] : memref<416x128xf32, #tpu.memory_space<vmem>>, vector<1x128xf32>
    %c396 = arith.constant 396 : index
    %c0_63 = arith.constant 0 : index
    %221 = vector.load %arg1[%c396, %c0_63] : memref<416x128xf32, #tpu.memory_space<vmem>>, vector<1x128xf32>
    %222 = vector.broadcast %218 : vector<1x128xf32> to vector<8x128xf32>
    %223 = arith.cmpf oge, %0, %222 : vector<8x128xf32>
    %224 = vector.broadcast %219 : vector<1x128xf32> to vector<8x128xf32>
    %225 = arith.cmpf olt, %0, %224 : vector<8x128xf32>
    %226 = arith.andi %223, %225 : vector<8x128xi1>
    %227 = vector.broadcast %218 : vector<1x128xf32> to vector<8x128xf32>
    %228 = arith.subf %0, %227 : vector<8x128xf32>
    %229 = vector.broadcast %221 : vector<1x128xf32> to vector<8x128xf32>
    %230 = arith.mulf %228, %229 : vector<8x128xf32>
    %231 = vector.broadcast %220 : vector<1x128xf32> to vector<8x128xf32>
    %232 = arith.addf %231, %230 : vector<8x128xf32>
    %233 = arith.subf %232, %0 : vector<8x128xf32>
    %cst_64 = arith.constant 0.000000e+00 : f32
    %234 = vector.broadcast %cst_64 : f32 to vector<8x128xf32>
    %235 = arith.select %226, %233, %234 : vector<8x128xi1>, vector<8x128xf32>
    %c301 = arith.constant 301 : index
    %c0_65 = arith.constant 0 : index
    %236 = vector.load %arg1[%c301, %c0_65] : memref<416x128xf32, #tpu.memory_space<vmem>>, vector<1x128xf32>
    %c333 = arith.constant 333 : index
    %c0_66 = arith.constant 0 : index
    %237 = vector.load %arg1[%c333, %c0_66] : memref<416x128xf32, #tpu.memory_space<vmem>>, vector<1x128xf32>
    %c365 = arith.constant 365 : index
    %c0_67 = arith.constant 0 : index
    %238 = vector.load %arg1[%c365, %c0_67] : memref<416x128xf32, #tpu.memory_space<vmem>>, vector<1x128xf32>
    %c397 = arith.constant 397 : index
    %c0_68 = arith.constant 0 : index
    %239 = vector.load %arg1[%c397, %c0_68] : memref<416x128xf32, #tpu.memory_space<vmem>>, vector<1x128xf32>
    %240 = vector.broadcast %236 : vector<1x128xf32> to vector<8x128xf32>
    %241 = arith.cmpf oge, %0, %240 : vector<8x128xf32>
    %242 = vector.broadcast %237 : vector<1x128xf32> to vector<8x128xf32>
    %243 = arith.cmpf olt, %0, %242 : vector<8x128xf32>
    %244 = arith.andi %241, %243 : vector<8x128xi1>
    %245 = vector.broadcast %236 : vector<1x128xf32> to vector<8x128xf32>
    %246 = arith.subf %0, %245 : vector<8x128xf32>
    %247 = vector.broadcast %239 : vector<1x128xf32> to vector<8x128xf32>
    %248 = arith.mulf %246, %247 : vector<8x128xf32>
    %249 = vector.broadcast %238 : vector<1x128xf32> to vector<8x128xf32>
    %250 = arith.addf %249, %248 : vector<8x128xf32>
    %251 = arith.subf %250, %0 : vector<8x128xf32>
    %cst_69 = arith.constant 0.000000e+00 : f32
    %252 = vector.broadcast %cst_69 : f32 to vector<8x128xf32>
    %253 = arith.select %244, %251, %252 : vector<8x128xi1>, vector<8x128xf32>
    %c302 = arith.constant 302 : index
    %c0_70 = arith.constant 0 : index
    %254 = vector.load %arg1[%c302, %c0_70] : memref<416x128xf32, #tpu.memory_space<vmem>>, vector<1x128xf32>
    %c334 = arith.constant 334 : index
    %c0_71 = arith.constant 0 : index
    %255 = vector.load %arg1[%c334, %c0_71] : memref<416x128xf32, #tpu.memory_space<vmem>>, vector<1x128xf32>
    %c366 = arith.constant 366 : index
    %c0_72 = arith.constant 0 : index
    %256 = vector.load %arg1[%c366, %c0_72] : memref<416x128xf32, #tpu.memory_space<vmem>>, vector<1x128xf32>
    %c398 = arith.constant 398 : index
    %c0_73 = arith.constant 0 : index
    %257 = vector.load %arg1[%c398, %c0_73] : memref<416x128xf32, #tpu.memory_space<vmem>>, vector<1x128xf32>
    %258 = vector.broadcast %254 : vector<1x128xf32> to vector<8x128xf32>
    %259 = arith.cmpf oge, %0, %258 : vector<8x128xf32>
    %260 = vector.broadcast %255 : vector<1x128xf32> to vector<8x128xf32>
    %261 = arith.cmpf olt, %0, %260 : vector<8x128xf32>
    %262 = arith.andi %259, %261 : vector<8x128xi1>
    %263 = vector.broadcast %254 : vector<1x128xf32> to vector<8x128xf32>
    %264 = arith.subf %0, %263 : vector<8x128xf32>
    %265 = vector.broadcast %257 : vector<1x128xf32> to vector<8x128xf32>
    %266 = arith.mulf %264, %265 : vector<8x128xf32>
    %267 = vector.broadcast %256 : vector<1x128xf32> to vector<8x128xf32>
    %268 = arith.addf %267, %266 : vector<8x128xf32>
    %269 = arith.subf %268, %0 : vector<8x128xf32>
    %cst_74 = arith.constant 0.000000e+00 : f32
    %270 = vector.broadcast %cst_74 : f32 to vector<8x128xf32>
    %271 = arith.select %262, %269, %270 : vector<8x128xi1>, vector<8x128xf32>
    %c303 = arith.constant 303 : index
    %c0_75 = arith.constant 0 : index
    %272 = vector.load %arg1[%c303, %c0_75] : memref<416x128xf32, #tpu.memory_space<vmem>>, vector<1x128xf32>
    %c335 = arith.constant 335 : index
    %c0_76 = arith.constant 0 : index
    %273 = vector.load %arg1[%c335, %c0_76] : memref<416x128xf32, #tpu.memory_space<vmem>>, vector<1x128xf32>
    %c367 = arith.constant 367 : index
    %c0_77 = arith.constant 0 : index
    %274 = vector.load %arg1[%c367, %c0_77] : memref<416x128xf32, #tpu.memory_space<vmem>>, vector<1x128xf32>
    %c399 = arith.constant 399 : index
    %c0_78 = arith.constant 0 : index
    %275 = vector.load %arg1[%c399, %c0_78] : memref<416x128xf32, #tpu.memory_space<vmem>>, vector<1x128xf32>
    %276 = vector.broadcast %272 : vector<1x128xf32> to vector<8x128xf32>
    %277 = arith.cmpf oge, %0, %276 : vector<8x128xf32>
    %278 = vector.broadcast %273 : vector<1x128xf32> to vector<8x128xf32>
    %279 = arith.cmpf olt, %0, %278 : vector<8x128xf32>
    %280 = arith.andi %277, %279 : vector<8x128xi1>
    %281 = vector.broadcast %272 : vector<1x128xf32> to vector<8x128xf32>
    %282 = arith.subf %0, %281 : vector<8x128xf32>
    %283 = vector.broadcast %275 : vector<1x128xf32> to vector<8x128xf32>
    %284 = arith.mulf %282, %283 : vector<8x128xf32>
    %285 = vector.broadcast %274 : vector<1x128xf32> to vector<8x128xf32>
    %286 = arith.addf %285, %284 : vector<8x128xf32>
    %287 = arith.subf %286, %0 : vector<8x128xf32>
    %cst_79 = arith.constant 0.000000e+00 : f32
    %288 = vector.broadcast %cst_79 : f32 to vector<8x128xf32>
    %289 = arith.select %280, %287, %288 : vector<8x128xi1>, vector<8x128xf32>
    %c304 = arith.constant 304 : index
    %c0_80 = arith.constant 0 : index
    %290 = vector.load %arg1[%c304, %c0_80] : memref<416x128xf32, #tpu.memory_space<vmem>>, vector<1x128xf32>
    %c336 = arith.constant 336 : index
    %c0_81 = arith.constant 0 : index
    %291 = vector.load %arg1[%c336, %c0_81] : memref<416x128xf32, #tpu.memory_space<vmem>>, vector<1x128xf32>
    %c368 = arith.constant 368 : index
    %c0_82 = arith.constant 0 : index
    %292 = vector.load %arg1[%c368, %c0_82] : memref<416x128xf32, #tpu.memory_space<vmem>>, vector<1x128xf32>
    %c400 = arith.constant 400 : index
    %c0_83 = arith.constant 0 : index
    %293 = vector.load %arg1[%c400, %c0_83] : memref<416x128xf32, #tpu.memory_space<vmem>>, vector<1x128xf32>
    %294 = vector.broadcast %290 : vector<1x128xf32> to vector<8x128xf32>
    %295 = arith.cmpf oge, %0, %294 : vector<8x128xf32>
    %296 = vector.broadcast %291 : vector<1x128xf32> to vector<8x128xf32>
    %297 = arith.cmpf olt, %0, %296 : vector<8x128xf32>
    %298 = arith.andi %295, %297 : vector<8x128xi1>
    %299 = vector.broadcast %290 : vector<1x128xf32> to vector<8x128xf32>
    %300 = arith.subf %0, %299 : vector<8x128xf32>
    %301 = vector.broadcast %293 : vector<1x128xf32> to vector<8x128xf32>
    %302 = arith.mulf %300, %301 : vector<8x128xf32>
    %303 = vector.broadcast %292 : vector<1x128xf32> to vector<8x128xf32>
    %304 = arith.addf %303, %302 : vector<8x128xf32>
    %305 = arith.subf %304, %0 : vector<8x128xf32>
    %cst_84 = arith.constant 0.000000e+00 : f32
    %306 = vector.broadcast %cst_84 : f32 to vector<8x128xf32>
    %307 = arith.select %298, %305, %306 : vector<8x128xi1>, vector<8x128xf32>
    %c305 = arith.constant 305 : index
    %c0_85 = arith.constant 0 : index
    %308 = vector.load %arg1[%c305, %c0_85] : memref<416x128xf32, #tpu.memory_space<vmem>>, vector<1x128xf32>
    %c337 = arith.constant 337 : index
    %c0_86 = arith.constant 0 : index
    %309 = vector.load %arg1[%c337, %c0_86] : memref<416x128xf32, #tpu.memory_space<vmem>>, vector<1x128xf32>
    %c369 = arith.constant 369 : index
    %c0_87 = arith.constant 0 : index
    %310 = vector.load %arg1[%c369, %c0_87] : memref<416x128xf32, #tpu.memory_space<vmem>>, vector<1x128xf32>
    %c401 = arith.constant 401 : index
    %c0_88 = arith.constant 0 : index
    %311 = vector.load %arg1[%c401, %c0_88] : memref<416x128xf32, #tpu.memory_space<vmem>>, vector<1x128xf32>
    %312 = vector.broadcast %308 : vector<1x128xf32> to vector<8x128xf32>
    %313 = arith.cmpf oge, %0, %312 : vector<8x128xf32>
    %314 = vector.broadcast %309 : vector<1x128xf32> to vector<8x128xf32>
    %315 = arith.cmpf olt, %0, %314 : vector<8x128xf32>
    %316 = arith.andi %313, %315 : vector<8x128xi1>
    %317 = vector.broadcast %308 : vector<1x128xf32> to vector<8x128xf32>
    %318 = arith.subf %0, %317 : vector<8x128xf32>
    %319 = vector.broadcast %311 : vector<1x128xf32> to vector<8x128xf32>
    %320 = arith.mulf %318, %319 : vector<8x128xf32>
    %321 = vector.broadcast %310 : vector<1x128xf32> to vector<8x128xf32>
    %322 = arith.addf %321, %320 : vector<8x128xf32>
    %323 = arith.subf %322, %0 : vector<8x128xf32>
    %cst_89 = arith.constant 0.000000e+00 : f32
    %324 = vector.broadcast %cst_89 : f32 to vector<8x128xf32>
    %325 = arith.select %316, %323, %324 : vector<8x128xi1>, vector<8x128xf32>
    %c306 = arith.constant 306 : index
    %c0_90 = arith.constant 0 : index
    %326 = vector.load %arg1[%c306, %c0_90] : memref<416x128xf32, #tpu.memory_space<vmem>>, vector<1x128xf32>
    %c338 = arith.constant 338 : index
    %c0_91 = arith.constant 0 : index
    %327 = vector.load %arg1[%c338, %c0_91] : memref<416x128xf32, #tpu.memory_space<vmem>>, vector<1x128xf32>
    %c370 = arith.constant 370 : index
    %c0_92 = arith.constant 0 : index
    %328 = vector.load %arg1[%c370, %c0_92] : memref<416x128xf32, #tpu.memory_space<vmem>>, vector<1x128xf32>
    %c402 = arith.constant 402 : index
    %c0_93 = arith.constant 0 : index
    %329 = vector.load %arg1[%c402, %c0_93] : memref<416x128xf32, #tpu.memory_space<vmem>>, vector<1x128xf32>
    %330 = vector.broadcast %326 : vector<1x128xf32> to vector<8x128xf32>
    %331 = arith.cmpf oge, %0, %330 : vector<8x128xf32>
    %332 = vector.broadcast %327 : vector<1x128xf32> to vector<8x128xf32>
    %333 = arith.cmpf olt, %0, %332 : vector<8x128xf32>
    %334 = arith.andi %331, %333 : vector<8x128xi1>
    %335 = vector.broadcast %326 : vector<1x128xf32> to vector<8x128xf32>
    %336 = arith.subf %0, %335 : vector<8x128xf32>
    %337 = vector.broadcast %329 : vector<1x128xf32> to vector<8x128xf32>
    %338 = arith.mulf %336, %337 : vector<8x128xf32>
    %339 = vector.broadcast %328 : vector<1x128xf32> to vector<8x128xf32>
    %340 = arith.addf %339, %338 : vector<8x128xf32>
    %341 = arith.subf %340, %0 : vector<8x128xf32>
    %cst_94 = arith.constant 0.000000e+00 : f32
    %342 = vector.broadcast %cst_94 : f32 to vector<8x128xf32>
    %343 = arith.select %334, %341, %342 : vector<8x128xi1>, vector<8x128xf32>
    %c307 = arith.constant 307 : index
    %c0_95 = arith.constant 0 : index
    %344 = vector.load %arg1[%c307, %c0_95] : memref<416x128xf32, #tpu.memory_space<vmem>>, vector<1x128xf32>
    %c339 = arith.constant 339 : index
    %c0_96 = arith.constant 0 : index
    %345 = vector.load %arg1[%c339, %c0_96] : memref<416x128xf32, #tpu.memory_space<vmem>>, vector<1x128xf32>
    %c371 = arith.constant 371 : index
    %c0_97 = arith.constant 0 : index
    %346 = vector.load %arg1[%c371, %c0_97] : memref<416x128xf32, #tpu.memory_space<vmem>>, vector<1x128xf32>
    %c403 = arith.constant 403 : index
    %c0_98 = arith.constant 0 : index
    %347 = vector.load %arg1[%c403, %c0_98] : memref<416x128xf32, #tpu.memory_space<vmem>>, vector<1x128xf32>
    %348 = vector.broadcast %344 : vector<1x128xf32> to vector<8x128xf32>
    %349 = arith.cmpf oge, %0, %348 : vector<8x128xf32>
    %350 = vector.broadcast %345 : vector<1x128xf32> to vector<8x128xf32>
    %351 = arith.cmpf olt, %0, %350 : vector<8x128xf32>
    %352 = arith.andi %349, %351 : vector<8x128xi1>
    %353 = vector.broadcast %344 : vector<1x128xf32> to vector<8x128xf32>
    %354 = arith.subf %0, %353 : vector<8x128xf32>
    %355 = vector.broadcast %347 : vector<1x128xf32> to vector<8x128xf32>
    %356 = arith.mulf %354, %355 : vector<8x128xf32>
    %357 = vector.broadcast %346 : vector<1x128xf32> to vector<8x128xf32>
    %358 = arith.addf %357, %356 : vector<8x128xf32>
    %359 = arith.subf %358, %0 : vector<8x128xf32>
    %cst_99 = arith.constant 0.000000e+00 : f32
    %360 = vector.broadcast %cst_99 : f32 to vector<8x128xf32>
    %361 = arith.select %352, %359, %360 : vector<8x128xi1>, vector<8x128xf32>
    %c308 = arith.constant 308 : index
    %c0_100 = arith.constant 0 : index
    %362 = vector.load %arg1[%c308, %c0_100] : memref<416x128xf32, #tpu.memory_space<vmem>>, vector<1x128xf32>
    %c340 = arith.constant 340 : index
    %c0_101 = arith.constant 0 : index
    %363 = vector.load %arg1[%c340, %c0_101] : memref<416x128xf32, #tpu.memory_space<vmem>>, vector<1x128xf32>
    %c372 = arith.constant 372 : index
    %c0_102 = arith.constant 0 : index
    %364 = vector.load %arg1[%c372, %c0_102] : memref<416x128xf32, #tpu.memory_space<vmem>>, vector<1x128xf32>
    %c404 = arith.constant 404 : index
    %c0_103 = arith.constant 0 : index
    %365 = vector.load %arg1[%c404, %c0_103] : memref<416x128xf32, #tpu.memory_space<vmem>>, vector<1x128xf32>
    %366 = vector.broadcast %362 : vector<1x128xf32> to vector<8x128xf32>
    %367 = arith.cmpf oge, %0, %366 : vector<8x128xf32>
    %368 = vector.broadcast %363 : vector<1x128xf32> to vector<8x128xf32>
    %369 = arith.cmpf olt, %0, %368 : vector<8x128xf32>
    %370 = arith.andi %367, %369 : vector<8x128xi1>
    %371 = vector.broadcast %362 : vector<1x128xf32> to vector<8x128xf32>
    %372 = arith.subf %0, %371 : vector<8x128xf32>
    %373 = vector.broadcast %365 : vector<1x128xf32> to vector<8x128xf32>
    %374 = arith.mulf %372, %373 : vector<8x128xf32>
    %375 = vector.broadcast %364 : vector<1x128xf32> to vector<8x128xf32>
    %376 = arith.addf %375, %374 : vector<8x128xf32>
    %377 = arith.subf %376, %0 : vector<8x128xf32>
    %cst_104 = arith.constant 0.000000e+00 : f32
    %378 = vector.broadcast %cst_104 : f32 to vector<8x128xf32>
    %379 = arith.select %370, %377, %378 : vector<8x128xi1>, vector<8x128xf32>
    %c309 = arith.constant 309 : index
    %c0_105 = arith.constant 0 : index
    %380 = vector.load %arg1[%c309, %c0_105] : memref<416x128xf32, #tpu.memory_space<vmem>>, vector<1x128xf32>
    %c341 = arith.constant 341 : index
    %c0_106 = arith.constant 0 : index
    %381 = vector.load %arg1[%c341, %c0_106] : memref<416x128xf32, #tpu.memory_space<vmem>>, vector<1x128xf32>
    %c373 = arith.constant 373 : index
    %c0_107 = arith.constant 0 : index
    %382 = vector.load %arg1[%c373, %c0_107] : memref<416x128xf32, #tpu.memory_space<vmem>>, vector<1x128xf32>
    %c405 = arith.constant 405 : index
    %c0_108 = arith.constant 0 : index
    %383 = vector.load %arg1[%c405, %c0_108] : memref<416x128xf32, #tpu.memory_space<vmem>>, vector<1x128xf32>
    %384 = vector.broadcast %380 : vector<1x128xf32> to vector<8x128xf32>
    %385 = arith.cmpf oge, %0, %384 : vector<8x128xf32>
    %386 = vector.broadcast %381 : vector<1x128xf32> to vector<8x128xf32>
    %387 = arith.cmpf olt, %0, %386 : vector<8x128xf32>
    %388 = arith.andi %385, %387 : vector<8x128xi1>
    %389 = vector.broadcast %380 : vector<1x128xf32> to vector<8x128xf32>
    %390 = arith.subf %0, %389 : vector<8x128xf32>
    %391 = vector.broadcast %383 : vector<1x128xf32> to vector<8x128xf32>
    %392 = arith.mulf %390, %391 : vector<8x128xf32>
    %393 = vector.broadcast %382 : vector<1x128xf32> to vector<8x128xf32>
    %394 = arith.addf %393, %392 : vector<8x128xf32>
    %395 = arith.subf %394, %0 : vector<8x128xf32>
    %cst_109 = arith.constant 0.000000e+00 : f32
    %396 = vector.broadcast %cst_109 : f32 to vector<8x128xf32>
    %397 = arith.select %388, %395, %396 : vector<8x128xi1>, vector<8x128xf32>
    %c310 = arith.constant 310 : index
    %c0_110 = arith.constant 0 : index
    %398 = vector.load %arg1[%c310, %c0_110] : memref<416x128xf32, #tpu.memory_space<vmem>>, vector<1x128xf32>
    %c342 = arith.constant 342 : index
    %c0_111 = arith.constant 0 : index
    %399 = vector.load %arg1[%c342, %c0_111] : memref<416x128xf32, #tpu.memory_space<vmem>>, vector<1x128xf32>
    %c374 = arith.constant 374 : index
    %c0_112 = arith.constant 0 : index
    %400 = vector.load %arg1[%c374, %c0_112] : memref<416x128xf32, #tpu.memory_space<vmem>>, vector<1x128xf32>
    %c406 = arith.constant 406 : index
    %c0_113 = arith.constant 0 : index
    %401 = vector.load %arg1[%c406, %c0_113] : memref<416x128xf32, #tpu.memory_space<vmem>>, vector<1x128xf32>
    %402 = vector.broadcast %398 : vector<1x128xf32> to vector<8x128xf32>
    %403 = arith.cmpf oge, %0, %402 : vector<8x128xf32>
    %404 = vector.broadcast %399 : vector<1x128xf32> to vector<8x128xf32>
    %405 = arith.cmpf olt, %0, %404 : vector<8x128xf32>
    %406 = arith.andi %403, %405 : vector<8x128xi1>
    %407 = vector.broadcast %398 : vector<1x128xf32> to vector<8x128xf32>
    %408 = arith.subf %0, %407 : vector<8x128xf32>
    %409 = vector.broadcast %401 : vector<1x128xf32> to vector<8x128xf32>
    %410 = arith.mulf %408, %409 : vector<8x128xf32>
    %411 = vector.broadcast %400 : vector<1x128xf32> to vector<8x128xf32>
    %412 = arith.addf %411, %410 : vector<8x128xf32>
    %413 = arith.subf %412, %0 : vector<8x128xf32>
    %cst_114 = arith.constant 0.000000e+00 : f32
    %414 = vector.broadcast %cst_114 : f32 to vector<8x128xf32>
    %415 = arith.select %406, %413, %414 : vector<8x128xi1>, vector<8x128xf32>
    %c311 = arith.constant 311 : index
    %c0_115 = arith.constant 0 : index
    %416 = vector.load %arg1[%c311, %c0_115] : memref<416x128xf32, #tpu.memory_space<vmem>>, vector<1x128xf32>
    %c343 = arith.constant 343 : index
    %c0_116 = arith.constant 0 : index
    %417 = vector.load %arg1[%c343, %c0_116] : memref<416x128xf32, #tpu.memory_space<vmem>>, vector<1x128xf32>
    %c375 = arith.constant 375 : index
    %c0_117 = arith.constant 0 : index
    %418 = vector.load %arg1[%c375, %c0_117] : memref<416x128xf32, #tpu.memory_space<vmem>>, vector<1x128xf32>
    %c407 = arith.constant 407 : index
    %c0_118 = arith.constant 0 : index
    %419 = vector.load %arg1[%c407, %c0_118] : memref<416x128xf32, #tpu.memory_space<vmem>>, vector<1x128xf32>
    %420 = vector.broadcast %416 : vector<1x128xf32> to vector<8x128xf32>
    %421 = arith.cmpf oge, %0, %420 : vector<8x128xf32>
    %422 = vector.broadcast %417 : vector<1x128xf32> to vector<8x128xf32>
    %423 = arith.cmpf olt, %0, %422 : vector<8x128xf32>
    %424 = arith.andi %421, %423 : vector<8x128xi1>
    %425 = vector.broadcast %416 : vector<1x128xf32> to vector<8x128xf32>
    %426 = arith.subf %0, %425 : vector<8x128xf32>
    %427 = vector.broadcast %419 : vector<1x128xf32> to vector<8x128xf32>
    %428 = arith.mulf %426, %427 : vector<8x128xf32>
    %429 = vector.broadcast %418 : vector<1x128xf32> to vector<8x128xf32>
    %430 = arith.addf %429, %428 : vector<8x128xf32>
    %431 = arith.subf %430, %0 : vector<8x128xf32>
    %cst_119 = arith.constant 0.000000e+00 : f32
    %432 = vector.broadcast %cst_119 : f32 to vector<8x128xf32>
    %433 = arith.select %424, %431, %432 : vector<8x128xi1>, vector<8x128xf32>
    %c312 = arith.constant 312 : index
    %c0_120 = arith.constant 0 : index
    %434 = vector.load %arg1[%c312, %c0_120] : memref<416x128xf32, #tpu.memory_space<vmem>>, vector<1x128xf32>
    %c344 = arith.constant 344 : index
    %c0_121 = arith.constant 0 : index
    %435 = vector.load %arg1[%c344, %c0_121] : memref<416x128xf32, #tpu.memory_space<vmem>>, vector<1x128xf32>
    %c376 = arith.constant 376 : index
    %c0_122 = arith.constant 0 : index
    %436 = vector.load %arg1[%c376, %c0_122] : memref<416x128xf32, #tpu.memory_space<vmem>>, vector<1x128xf32>
    %c408 = arith.constant 408 : index
    %c0_123 = arith.constant 0 : index
    %437 = vector.load %arg1[%c408, %c0_123] : memref<416x128xf32, #tpu.memory_space<vmem>>, vector<1x128xf32>
    %438 = vector.broadcast %434 : vector<1x128xf32> to vector<8x128xf32>
    %439 = arith.cmpf oge, %0, %438 : vector<8x128xf32>
    %440 = vector.broadcast %435 : vector<1x128xf32> to vector<8x128xf32>
    %441 = arith.cmpf olt, %0, %440 : vector<8x128xf32>
    %442 = arith.andi %439, %441 : vector<8x128xi1>
    %443 = vector.broadcast %434 : vector<1x128xf32> to vector<8x128xf32>
    %444 = arith.subf %0, %443 : vector<8x128xf32>
    %445 = vector.broadcast %437 : vector<1x128xf32> to vector<8x128xf32>
    %446 = arith.mulf %444, %445 : vector<8x128xf32>
    %447 = vector.broadcast %436 : vector<1x128xf32> to vector<8x128xf32>
    %448 = arith.addf %447, %446 : vector<8x128xf32>
    %449 = arith.subf %448, %0 : vector<8x128xf32>
    %cst_124 = arith.constant 0.000000e+00 : f32
    %450 = vector.broadcast %cst_124 : f32 to vector<8x128xf32>
    %451 = arith.select %442, %449, %450 : vector<8x128xi1>, vector<8x128xf32>
    %c313 = arith.constant 313 : index
    %c0_125 = arith.constant 0 : index
    %452 = vector.load %arg1[%c313, %c0_125] : memref<416x128xf32, #tpu.memory_space<vmem>>, vector<1x128xf32>
    %c345 = arith.constant 345 : index
    %c0_126 = arith.constant 0 : index
    %453 = vector.load %arg1[%c345, %c0_126] : memref<416x128xf32, #tpu.memory_space<vmem>>, vector<1x128xf32>
    %c377 = arith.constant 377 : index
    %c0_127 = arith.constant 0 : index
    %454 = vector.load %arg1[%c377, %c0_127] : memref<416x128xf32, #tpu.memory_space<vmem>>, vector<1x128xf32>
    %c409 = arith.constant 409 : index
    %c0_128 = arith.constant 0 : index
    %455 = vector.load %arg1[%c409, %c0_128] : memref<416x128xf32, #tpu.memory_space<vmem>>, vector<1x128xf32>
    %456 = vector.broadcast %452 : vector<1x128xf32> to vector<8x128xf32>
    %457 = arith.cmpf oge, %0, %456 : vector<8x128xf32>
    %458 = vector.broadcast %453 : vector<1x128xf32> to vector<8x128xf32>
    %459 = arith.cmpf olt, %0, %458 : vector<8x128xf32>
    %460 = arith.andi %457, %459 : vector<8x128xi1>
    %461 = vector.broadcast %452 : vector<1x128xf32> to vector<8x128xf32>
    %462 = arith.subf %0, %461 : vector<8x128xf32>
    %463 = vector.broadcast %455 : vector<1x128xf32> to vector<8x128xf32>
    %464 = arith.mulf %462, %463 : vector<8x128xf32>
    %465 = vector.broadcast %454 : vector<1x128xf32> to vector<8x128xf32>
    %466 = arith.addf %465, %464 : vector<8x128xf32>
    %467 = arith.subf %466, %0 : vector<8x128xf32>
    %cst_129 = arith.constant 0.000000e+00 : f32
    %468 = vector.broadcast %cst_129 : f32 to vector<8x128xf32>
    %469 = arith.select %460, %467, %468 : vector<8x128xi1>, vector<8x128xf32>
    %c314 = arith.constant 314 : index
    %c0_130 = arith.constant 0 : index
    %470 = vector.load %arg1[%c314, %c0_130] : memref<416x128xf32, #tpu.memory_space<vmem>>, vector<1x128xf32>
    %c346 = arith.constant 346 : index
    %c0_131 = arith.constant 0 : index
    %471 = vector.load %arg1[%c346, %c0_131] : memref<416x128xf32, #tpu.memory_space<vmem>>, vector<1x128xf32>
    %c378 = arith.constant 378 : index
    %c0_132 = arith.constant 0 : index
    %472 = vector.load %arg1[%c378, %c0_132] : memref<416x128xf32, #tpu.memory_space<vmem>>, vector<1x128xf32>
    %c410 = arith.constant 410 : index
    %c0_133 = arith.constant 0 : index
    %473 = vector.load %arg1[%c410, %c0_133] : memref<416x128xf32, #tpu.memory_space<vmem>>, vector<1x128xf32>
    %474 = vector.broadcast %470 : vector<1x128xf32> to vector<8x128xf32>
    %475 = arith.cmpf oge, %0, %474 : vector<8x128xf32>
    %476 = vector.broadcast %471 : vector<1x128xf32> to vector<8x128xf32>
    %477 = arith.cmpf olt, %0, %476 : vector<8x128xf32>
    %478 = arith.andi %475, %477 : vector<8x128xi1>
    %479 = vector.broadcast %470 : vector<1x128xf32> to vector<8x128xf32>
    %480 = arith.subf %0, %479 : vector<8x128xf32>
    %481 = vector.broadcast %473 : vector<1x128xf32> to vector<8x128xf32>
    %482 = arith.mulf %480, %481 : vector<8x128xf32>
    %483 = vector.broadcast %472 : vector<1x128xf32> to vector<8x128xf32>
    %484 = arith.addf %483, %482 : vector<8x128xf32>
    %485 = arith.subf %484, %0 : vector<8x128xf32>
    %cst_134 = arith.constant 0.000000e+00 : f32
    %486 = vector.broadcast %cst_134 : f32 to vector<8x128xf32>
    %487 = arith.select %478, %485, %486 : vector<8x128xi1>, vector<8x128xf32>
    %c315 = arith.constant 315 : index
    %c0_135 = arith.constant 0 : index
    %488 = vector.load %arg1[%c315, %c0_135] : memref<416x128xf32, #tpu.memory_space<vmem>>, vector<1x128xf32>
    %c347 = arith.constant 347 : index
    %c0_136 = arith.constant 0 : index
    %489 = vector.load %arg1[%c347, %c0_136] : memref<416x128xf32, #tpu.memory_space<vmem>>, vector<1x128xf32>
    %c379 = arith.constant 379 : index
    %c0_137 = arith.constant 0 : index
    %490 = vector.load %arg1[%c379, %c0_137] : memref<416x128xf32, #tpu.memory_space<vmem>>, vector<1x128xf32>
    %c411 = arith.constant 411 : index
    %c0_138 = arith.constant 0 : index
    %491 = vector.load %arg1[%c411, %c0_138] : memref<416x128xf32, #tpu.memory_space<vmem>>, vector<1x128xf32>
    %492 = vector.broadcast %488 : vector<1x128xf32> to vector<8x128xf32>
    %493 = arith.cmpf oge, %0, %492 : vector<8x128xf32>
    %494 = vector.broadcast %489 : vector<1x128xf32> to vector<8x128xf32>
    %495 = arith.cmpf olt, %0, %494 : vector<8x128xf32>
    %496 = arith.andi %493, %495 : vector<8x128xi1>
    %497 = vector.broadcast %488 : vector<1x128xf32> to vector<8x128xf32>
    %498 = arith.subf %0, %497 : vector<8x128xf32>
    %499 = vector.broadcast %491 : vector<1x128xf32> to vector<8x128xf32>
    %500 = arith.mulf %498, %499 : vector<8x128xf32>
    %501 = vector.broadcast %490 : vector<1x128xf32> to vector<8x128xf32>
    %502 = arith.addf %501, %500 : vector<8x128xf32>
    %503 = arith.subf %502, %0 : vector<8x128xf32>
    %cst_139 = arith.constant 0.000000e+00 : f32
    %504 = vector.broadcast %cst_139 : f32 to vector<8x128xf32>
    %505 = arith.select %496, %503, %504 : vector<8x128xi1>, vector<8x128xf32>
    %c316 = arith.constant 316 : index
    %c0_140 = arith.constant 0 : index
    %506 = vector.load %arg1[%c316, %c0_140] : memref<416x128xf32, #tpu.memory_space<vmem>>, vector<1x128xf32>
    %c348 = arith.constant 348 : index
    %c0_141 = arith.constant 0 : index
    %507 = vector.load %arg1[%c348, %c0_141] : memref<416x128xf32, #tpu.memory_space<vmem>>, vector<1x128xf32>
    %c380 = arith.constant 380 : index
    %c0_142 = arith.constant 0 : index
    %508 = vector.load %arg1[%c380, %c0_142] : memref<416x128xf32, #tpu.memory_space<vmem>>, vector<1x128xf32>
    %c412 = arith.constant 412 : index
    %c0_143 = arith.constant 0 : index
    %509 = vector.load %arg1[%c412, %c0_143] : memref<416x128xf32, #tpu.memory_space<vmem>>, vector<1x128xf32>
    %510 = vector.broadcast %506 : vector<1x128xf32> to vector<8x128xf32>
    %511 = arith.cmpf oge, %0, %510 : vector<8x128xf32>
    %512 = vector.broadcast %507 : vector<1x128xf32> to vector<8x128xf32>
    %513 = arith.cmpf olt, %0, %512 : vector<8x128xf32>
    %514 = arith.andi %511, %513 : vector<8x128xi1>
    %515 = vector.broadcast %506 : vector<1x128xf32> to vector<8x128xf32>
    %516 = arith.subf %0, %515 : vector<8x128xf32>
    %517 = vector.broadcast %509 : vector<1x128xf32> to vector<8x128xf32>
    %518 = arith.mulf %516, %517 : vector<8x128xf32>
    %519 = vector.broadcast %508 : vector<1x128xf32> to vector<8x128xf32>
    %520 = arith.addf %519, %518 : vector<8x128xf32>
    %521 = arith.subf %520, %0 : vector<8x128xf32>
    %cst_144 = arith.constant 0.000000e+00 : f32
    %522 = vector.broadcast %cst_144 : f32 to vector<8x128xf32>
    %523 = arith.select %514, %521, %522 : vector<8x128xi1>, vector<8x128xf32>
    %c317 = arith.constant 317 : index
    %c0_145 = arith.constant 0 : index
    %524 = vector.load %arg1[%c317, %c0_145] : memref<416x128xf32, #tpu.memory_space<vmem>>, vector<1x128xf32>
    %c349 = arith.constant 349 : index
    %c0_146 = arith.constant 0 : index
    %525 = vector.load %arg1[%c349, %c0_146] : memref<416x128xf32, #tpu.memory_space<vmem>>, vector<1x128xf32>
    %c381 = arith.constant 381 : index
    %c0_147 = arith.constant 0 : index
    %526 = vector.load %arg1[%c381, %c0_147] : memref<416x128xf32, #tpu.memory_space<vmem>>, vector<1x128xf32>
    %c413 = arith.constant 413 : index
    %c0_148 = arith.constant 0 : index
    %527 = vector.load %arg1[%c413, %c0_148] : memref<416x128xf32, #tpu.memory_space<vmem>>, vector<1x128xf32>
    %528 = vector.broadcast %524 : vector<1x128xf32> to vector<8x128xf32>
    %529 = arith.cmpf oge, %0, %528 : vector<8x128xf32>
    %530 = vector.broadcast %525 : vector<1x128xf32> to vector<8x128xf32>
    %531 = arith.cmpf olt, %0, %530 : vector<8x128xf32>
    %532 = arith.andi %529, %531 : vector<8x128xi1>
    %533 = vector.broadcast %524 : vector<1x128xf32> to vector<8x128xf32>
    %534 = arith.subf %0, %533 : vector<8x128xf32>
    %535 = vector.broadcast %527 : vector<1x128xf32> to vector<8x128xf32>
    %536 = arith.mulf %534, %535 : vector<8x128xf32>
    %537 = vector.broadcast %526 : vector<1x128xf32> to vector<8x128xf32>
    %538 = arith.addf %537, %536 : vector<8x128xf32>
    %539 = arith.subf %538, %0 : vector<8x128xf32>
    %cst_149 = arith.constant 0.000000e+00 : f32
    %540 = vector.broadcast %cst_149 : f32 to vector<8x128xf32>
    %541 = arith.select %532, %539, %540 : vector<8x128xi1>, vector<8x128xf32>
    %542 = arith.addf %19, %37 : vector<8x128xf32>
    %543 = arith.addf %55, %73 : vector<8x128xf32>
    %544 = arith.addf %91, %109 : vector<8x128xf32>
    %545 = arith.addf %127, %145 : vector<8x128xf32>
    %546 = arith.addf %163, %181 : vector<8x128xf32>
    %547 = arith.addf %199, %217 : vector<8x128xf32>
    %548 = arith.addf %235, %253 : vector<8x128xf32>
    %549 = arith.addf %271, %289 : vector<8x128xf32>
    %550 = arith.addf %307, %325 : vector<8x128xf32>
    %551 = arith.addf %343, %361 : vector<8x128xf32>
    %552 = arith.addf %379, %397 : vector<8x128xf32>
    %553 = arith.addf %415, %433 : vector<8x128xf32>
    %554 = arith.addf %451, %469 : vector<8x128xf32>
    %555 = arith.addf %487, %505 : vector<8x128xf32>
    %556 = arith.addf %523, %541 : vector<8x128xf32>
    %557 = arith.addf %542, %543 : vector<8x128xf32>
    %558 = arith.addf %544, %545 : vector<8x128xf32>
    %559 = arith.addf %546, %547 : vector<8x128xf32>
    %560 = arith.addf %548, %549 : vector<8x128xf32>
    %561 = arith.addf %550, %551 : vector<8x128xf32>
    %562 = arith.addf %552, %553 : vector<8x128xf32>
    %563 = arith.addf %554, %555 : vector<8x128xf32>
    %564 = arith.addf %557, %558 : vector<8x128xf32>
    %565 = arith.addf %559, %560 : vector<8x128xf32>
    %566 = arith.addf %561, %562 : vector<8x128xf32>
    %567 = arith.addf %563, %556 : vector<8x128xf32>
    %568 = arith.addf %564, %565 : vector<8x128xf32>
    %569 = arith.addf %566, %567 : vector<8x128xf32>
    %570 = arith.addf %568, %569 : vector<8x128xf32>
    %571 = arith.addf %0, %570 : vector<8x128xf32>
    %c4_i32 = arith.constant 4 : i32
    %572 = vector.broadcast %c4_i32 : i32 to vector<8x128xi32>
    %573 = arith.cmpi slt, %1, %572 : vector<8x128xi32>
    %cst_150 = arith.constant 0.000000e+00 : f32
    %574 = vector.broadcast %cst_150 : f32 to vector<8x128xf32>
    %575 = arith.select %573, %571, %574 : vector<8x128xi1>, vector<8x128xf32>
    %cst_151 = arith.constant dense<0.000000e+00> : vector<8xf32>
    %576 = vector.multi_reduction <add>, %575, %cst_151 [1] : vector<8x128xf32> to vector<8xf32>
    %577 = vector.shape_cast %576 : vector<8xf32> to vector<8x1xf32>
    %cst_152 = arith.constant 4.000000e+00 : f32
    %578 = vector.broadcast %cst_152 : f32 to vector<8x1xf32>
    %579 = arith.divf %577, %578 : vector<8x1xf32>
    %580 = vector.broadcast %579 : vector<8x1xf32> to vector<8x128xf32>
    %581 = arith.subf %571, %580 : vector<8x128xf32>
    %cst_153 = arith.constant 0.000000e+00 : f32
    %582 = vector.broadcast %cst_153 : f32 to vector<8x128xf32>
    %583 = arith.select %573, %581, %582 : vector<8x128xi1>, vector<8x128xf32>
    %584 = arith.mulf %583, %583 : vector<8x128xf32>
    %cst_154 = arith.constant dense<0.000000e+00> : vector<8xf32>
    %585 = vector.multi_reduction <add>, %584, %cst_154 [1] : vector<8x128xf32> to vector<8xf32>
    %586 = vector.shape_cast %585 : vector<8xf32> to vector<8x1xf32>
    %cst_155 = arith.constant 3.000000e+00 : f32
    %587 = vector.broadcast %cst_155 : f32 to vector<8x1xf32>
    %588 = arith.divf %586, %587 : vector<8x1xf32>
    %589 = math.sqrt %588 : vector<8x1xf32>
    %c4_i32_156 = arith.constant 4 : i32
    %590 = vector.broadcast %c4_i32_156 : i32 to vector<8x128xi32>
    %591 = arith.cmpi eq, %1, %590 : vector<8x128xi32>
    %592 = vector.broadcast %589 : vector<8x1xf32> to vector<8x128xf32>
    %593 = arith.mulf %592, %571 : vector<8x128xf32>
    %594 = vector.broadcast %579 : vector<8x1xf32> to vector<8x128xf32>
    %595 = arith.addf %593, %594 : vector<8x128xf32>
    %596 = arith.select %591, %595, %571 : vector<8x128xi1>, vector<8x128xf32>
    %c408_157 = arith.constant 408 : index
    %c0_158 = arith.constant 0 : index
    %597 = vector.load %arg2[%c408_157, %c0_158] : memref<544x32xf32, #tpu.memory_space<vmem>>, vector<128x32xf32>
    %cst_159 = arith.constant dense<0.000000e+00> : vector<8x32xf32>
    %598 = tpu.matmul %596, %597, %cst_159 {dimension_numbers = #tpu.dot_dimension_numbers<[1], [0], [0], [1], [0, 0, 1, 1], [], []>} : vector<8x128xf32>, vector<128x32xf32>, vector<8x32xf32> -> vector<8x32xf32>
    %c536 = arith.constant 536 : index
    %c0_160 = arith.constant 0 : index
    %599 = vector.load %arg2[%c536, %c0_160] : memref<544x32xf32, #tpu.memory_space<vmem>>, vector<1x32xf32>
    %600 = vector.broadcast %599 : vector<1x32xf32> to vector<8x32xf32>
    %601 = arith.addf %598, %600 : vector<8x32xf32>
    %602 = math.tanh %601 : vector<8x32xf32>
    %c120 = arith.constant 120 : index
    %c0_161 = arith.constant 0 : index
    %603 = vector.load %arg3[%c120, %c0_161] : memref<160x256xf32, #tpu.memory_space<vmem>>, vector<32x256xf32>
    %cst_162 = arith.constant dense<0.000000e+00> : vector<8x256xf32>
    %604 = tpu.matmul %602, %603, %cst_162 {dimension_numbers = #tpu.dot_dimension_numbers<[1], [0], [0], [1], [0, 0, 1, 1], [], []>} : vector<8x32xf32>, vector<32x256xf32>, vector<8x256xf32> -> vector<8x256xf32>
    %c152 = arith.constant 152 : index
    %c0_163 = arith.constant 0 : index
    %605 = vector.load %arg3[%c152, %c0_163] : memref<160x256xf32, #tpu.memory_space<vmem>>, vector<1x256xf32>
    %606 = vector.broadcast %605 : vector<1x256xf32> to vector<8x256xf32>
    %607 = arith.addf %604, %606 : vector<8x256xf32>
    %608 = vector.extract_strided_slice %607 {offsets = [0, 0], sizes = [8, 128], strides = [1, 1]} : vector<8x256xf32> to vector<8x128xf32>
    %609 = math.tanh %608 : vector<8x128xf32>
    %610 = vector.extract_strided_slice %607 {offsets = [0, 128], sizes = [8, 128], strides = [1, 1]} : vector<8x256xf32> to vector<8x128xf32>
    %c0_i32 = arith.constant 0 : i32
    %611 = vector.broadcast %c0_i32 : i32 to vector<8x128xi32>
    %612 = arith.cmpi sge, %1, %611 : vector<8x128xi32>
    %c2_i32 = arith.constant 2 : i32
    %613 = vector.broadcast %c2_i32 : i32 to vector<8x128xi32>
    %614 = arith.cmpi slt, %1, %613 : vector<8x128xi32>
    %615 = arith.andi %612, %614 : vector<8x128xi1>
    %616 = arith.subf %596, %610 : vector<8x128xf32>
    %cst_164 = arith.constant 0.000000e+00 : f32
    %617 = vector.broadcast %cst_164 : f32 to vector<8x128xf32>
    %618 = arith.subf %617, %609 : vector<8x128xf32>
    %619 = math.exp %618 : vector<8x128xf32>
    %620 = arith.mulf %616, %619 : vector<8x128xf32>
    %621 = arith.select %615, %620, %596 : vector<8x128xi1>, vector<8x128xf32>
    %c281 = arith.constant 281 : index
    %c0_165 = arith.constant 0 : index
    %622 = vector.load %arg1[%c281, %c0_165] : memref<416x128xf32, #tpu.memory_space<vmem>>, vector<1x128xf32>
    %623 = vector.broadcast %622 : vector<1x128xf32> to vector<8x128xf32>
    %624 = arith.subf %621, %623 : vector<8x128xf32>
    %c273 = arith.constant 273 : index
    %c0_166 = arith.constant 0 : index
    %625 = vector.load %arg1[%c273, %c0_166] : memref<416x128xf32, #tpu.memory_space<vmem>>, vector<1x128xf32>
    %626 = vector.broadcast %625 : vector<1x128xf32> to vector<8x128xf32>
    %627 = arith.mulf %624, %626 : vector<8x128xf32>
    %c272 = arith.constant 272 : index
    %c0_167 = arith.constant 0 : index
    %628 = vector.load %arg2[%c272, %c0_167] : memref<544x32xf32, #tpu.memory_space<vmem>>, vector<128x32xf32>
    %cst_168 = arith.constant dense<0.000000e+00> : vector<8x32xf32>
    %629 = tpu.matmul %627, %628, %cst_168 {dimension_numbers = #tpu.dot_dimension_numbers<[1], [0], [0], [1], [0, 0, 1, 1], [], []>} : vector<8x128xf32>, vector<128x32xf32>, vector<8x32xf32> -> vector<8x32xf32>
    %c400_169 = arith.constant 400 : index
    %c0_170 = arith.constant 0 : index
    %630 = vector.load %arg2[%c400_169, %c0_170] : memref<544x32xf32, #tpu.memory_space<vmem>>, vector<1x32xf32>
    %631 = vector.broadcast %630 : vector<1x32xf32> to vector<8x32xf32>
    %632 = arith.addf %629, %631 : vector<8x32xf32>
    %633 = math.tanh %632 : vector<8x32xf32>
    %c80 = arith.constant 80 : index
    %c0_171 = arith.constant 0 : index
    %634 = vector.load %arg3[%c80, %c0_171] : memref<160x256xf32, #tpu.memory_space<vmem>>, vector<32x256xf32>
    %cst_172 = arith.constant dense<0.000000e+00> : vector<8x256xf32>
    %635 = tpu.matmul %633, %634, %cst_172 {dimension_numbers = #tpu.dot_dimension_numbers<[1], [0], [0], [1], [0, 0, 1, 1], [], []>} : vector<8x32xf32>, vector<32x256xf32>, vector<8x256xf32> -> vector<8x256xf32>
    %c112 = arith.constant 112 : index
    %c0_173 = arith.constant 0 : index
    %636 = vector.load %arg3[%c112, %c0_173] : memref<160x256xf32, #tpu.memory_space<vmem>>, vector<1x256xf32>
    %637 = vector.broadcast %636 : vector<1x256xf32> to vector<8x256xf32>
    %638 = arith.addf %635, %637 : vector<8x256xf32>
    %639 = vector.extract_strided_slice %638 {offsets = [0, 0], sizes = [8, 128], strides = [1, 1]} : vector<8x256xf32> to vector<8x128xf32>
    %640 = math.tanh %639 : vector<8x128xf32>
    %641 = vector.extract_strided_slice %638 {offsets = [0, 128], sizes = [8, 128], strides = [1, 1]} : vector<8x256xf32> to vector<8x128xf32>
    %c2_i32_174 = arith.constant 2 : i32
    %642 = vector.broadcast %c2_i32_174 : i32 to vector<8x128xi32>
    %643 = arith.cmpi sge, %1, %642 : vector<8x128xi32>
    %c5_i32 = arith.constant 5 : i32
    %644 = vector.broadcast %c5_i32 : i32 to vector<8x128xi32>
    %645 = arith.cmpi slt, %1, %644 : vector<8x128xi32>
    %646 = arith.andi %643, %645 : vector<8x128xi1>
    %647 = arith.subf %627, %641 : vector<8x128xf32>
    %cst_175 = arith.constant 0.000000e+00 : f32
    %648 = vector.broadcast %cst_175 : f32 to vector<8x128xf32>
    %649 = arith.subf %648, %640 : vector<8x128xf32>
    %650 = math.exp %649 : vector<8x128xf32>
    %651 = arith.mulf %647, %650 : vector<8x128xf32>
    %652 = arith.select %646, %651, %627 : vector<8x128xi1>, vector<8x128xf32>
    %c280 = arith.constant 280 : index
    %c0_176 = arith.constant 0 : index
    %653 = vector.load %arg1[%c280, %c0_176] : memref<416x128xf32, #tpu.memory_space<vmem>>, vector<1x128xf32>
    %654 = vector.broadcast %653 : vector<1x128xf32> to vector<8x128xf32>
    %655 = arith.subf %652, %654 : vector<8x128xf32>
    %c272_177 = arith.constant 272 : index
    %c0_178 = arith.constant 0 : index
    %656 = vector.load %arg1[%c272_177, %c0_178] : memref<416x128xf32, #tpu.memory_space<vmem>>, vector<1x128xf32>
    %657 = vector.broadcast %656 : vector<1x128xf32> to vector<8x128xf32>
    %658 = arith.mulf %655, %657 : vector<8x128xf32>
    %c144 = arith.constant 144 : index
    %c0_179 = arith.constant 0 : index
    %659 = vector.load %arg1[%c144, %c0_179] : memref<416x128xf32, #tpu.memory_space<vmem>>, vector<128x128xf32>
    %cst_180 = arith.constant dense<0.000000e+00> : vector<8x128xf32>
    %660 = tpu.matmul %658, %659, %cst_180 {dimension_numbers = #tpu.dot_dimension_numbers<[1], [0], [0], [1], [0, 0, 1, 1], [], []>} : vector<8x128xf32>, vector<128x128xf32>, vector<8x128xf32> -> vector<8x128xf32>
    %c5_i32_181 = arith.constant 5 : i32
    %661 = vector.broadcast %c5_i32_181 : i32 to vector<8x128xi32>
    %662 = arith.cmpi slt, %1, %661 : vector<8x128xi32>
    %cst_182 = arith.constant 0.000000e+00 : f32
    %663 = vector.broadcast %cst_182 : f32 to vector<8x128xf32>
    %664 = arith.select %662, %660, %663 : vector<8x128xi1>, vector<8x128xf32>
    %cst_183 = arith.constant dense<0.000000e+00> : vector<8xf32>
    %665 = vector.multi_reduction <add>, %664, %cst_183 [1] : vector<8x128xf32> to vector<8xf32>
    %666 = vector.shape_cast %665 : vector<8xf32> to vector<8x1xf32>
    %cst_184 = arith.constant 5.000000e+00 : f32
    %667 = vector.broadcast %cst_184 : f32 to vector<8x1xf32>
    %668 = arith.divf %666, %667 : vector<8x1xf32>
    %669 = vector.broadcast %668 : vector<8x1xf32> to vector<8x128xf32>
    %670 = arith.subf %660, %669 : vector<8x128xf32>
    %cst_185 = arith.constant 0.000000e+00 : f32
    %671 = vector.broadcast %cst_185 : f32 to vector<8x128xf32>
    %672 = arith.select %662, %670, %671 : vector<8x128xi1>, vector<8x128xf32>
    %673 = arith.mulf %672, %672 : vector<8x128xf32>
    %cst_186 = arith.constant dense<0.000000e+00> : vector<8xf32>
    %674 = vector.multi_reduction <add>, %673, %cst_186 [1] : vector<8x128xf32> to vector<8xf32>
    %675 = vector.shape_cast %674 : vector<8xf32> to vector<8x1xf32>
    %cst_187 = arith.constant 4.000000e+00 : f32
    %676 = vector.broadcast %cst_187 : f32 to vector<8x1xf32>
    %677 = arith.divf %675, %676 : vector<8x1xf32>
    %678 = math.sqrt %677 : vector<8x1xf32>
    %c5_i32_188 = arith.constant 5 : i32
    %679 = vector.broadcast %c5_i32_188 : i32 to vector<8x128xi32>
    %680 = arith.cmpi eq, %1, %679 : vector<8x128xi32>
    %681 = vector.broadcast %678 : vector<8x1xf32> to vector<8x128xf32>
    %682 = arith.mulf %681, %660 : vector<8x128xf32>
    %683 = vector.broadcast %668 : vector<8x1xf32> to vector<8x128xf32>
    %684 = arith.addf %682, %683 : vector<8x128xf32>
    %685 = arith.select %680, %684, %660 : vector<8x128xi1>, vector<8x128xf32>
    %c136 = arith.constant 136 : index
    %c0_189 = arith.constant 0 : index
    %686 = vector.load %arg2[%c136, %c0_189] : memref<544x32xf32, #tpu.memory_space<vmem>>, vector<128x32xf32>
    %cst_190 = arith.constant dense<0.000000e+00> : vector<8x32xf32>
    %687 = tpu.matmul %685, %686, %cst_190 {dimension_numbers = #tpu.dot_dimension_numbers<[1], [0], [0], [1], [0, 0, 1, 1], [], []>} : vector<8x128xf32>, vector<128x32xf32>, vector<8x32xf32> -> vector<8x32xf32>
    %c264 = arith.constant 264 : index
    %c0_191 = arith.constant 0 : index
    %688 = vector.load %arg2[%c264, %c0_191] : memref<544x32xf32, #tpu.memory_space<vmem>>, vector<1x32xf32>
    %689 = vector.broadcast %688 : vector<1x32xf32> to vector<8x32xf32>
    %690 = arith.addf %687, %689 : vector<8x32xf32>
    %691 = math.tanh %690 : vector<8x32xf32>
    %c40 = arith.constant 40 : index
    %c0_192 = arith.constant 0 : index
    %692 = vector.load %arg3[%c40, %c0_192] : memref<160x256xf32, #tpu.memory_space<vmem>>, vector<32x256xf32>
    %cst_193 = arith.constant dense<0.000000e+00> : vector<8x256xf32>
    %693 = tpu.matmul %691, %692, %cst_193 {dimension_numbers = #tpu.dot_dimension_numbers<[1], [0], [0], [1], [0, 0, 1, 1], [], []>} : vector<8x32xf32>, vector<32x256xf32>, vector<8x256xf32> -> vector<8x256xf32>
    %c72 = arith.constant 72 : index
    %c0_194 = arith.constant 0 : index
    %694 = vector.load %arg3[%c72, %c0_194] : memref<160x256xf32, #tpu.memory_space<vmem>>, vector<1x256xf32>
    %695 = vector.broadcast %694 : vector<1x256xf32> to vector<8x256xf32>
    %696 = arith.addf %693, %695 : vector<8x256xf32>
    %697 = vector.extract_strided_slice %696 {offsets = [0, 0], sizes = [8, 128], strides = [1, 1]} : vector<8x256xf32> to vector<8x128xf32>
    %698 = math.tanh %697 : vector<8x128xf32>
    %699 = vector.extract_strided_slice %696 {offsets = [0, 128], sizes = [8, 128], strides = [1, 1]} : vector<8x256xf32> to vector<8x128xf32>
    %c0_i32_195 = arith.constant 0 : i32
    %700 = vector.broadcast %c0_i32_195 : i32 to vector<8x128xi32>
    %701 = arith.cmpi sge, %1, %700 : vector<8x128xi32>
    %c3_i32 = arith.constant 3 : i32
    %702 = vector.broadcast %c3_i32 : i32 to vector<8x128xi32>
    %703 = arith.cmpi slt, %1, %702 : vector<8x128xi32>
    %704 = arith.andi %701, %703 : vector<8x128xi1>
    %705 = arith.subf %685, %699 : vector<8x128xf32>
    %cst_196 = arith.constant 0.000000e+00 : f32
    %706 = vector.broadcast %cst_196 : f32 to vector<8x128xf32>
    %707 = arith.subf %706, %698 : vector<8x128xf32>
    %708 = math.exp %707 : vector<8x128xf32>
    %709 = arith.mulf %705, %708 : vector<8x128xf32>
    %710 = arith.select %704, %709, %685 : vector<8x128xi1>, vector<8x128xf32>
    %c137 = arith.constant 137 : index
    %c0_197 = arith.constant 0 : index
    %711 = vector.load %arg1[%c137, %c0_197] : memref<416x128xf32, #tpu.memory_space<vmem>>, vector<1x128xf32>
    %712 = vector.broadcast %711 : vector<1x128xf32> to vector<8x128xf32>
    %713 = arith.subf %710, %712 : vector<8x128xf32>
    %c129 = arith.constant 129 : index
    %c0_198 = arith.constant 0 : index
    %714 = vector.load %arg1[%c129, %c0_198] : memref<416x128xf32, #tpu.memory_space<vmem>>, vector<1x128xf32>
    %715 = vector.broadcast %714 : vector<1x128xf32> to vector<8x128xf32>
    %716 = arith.mulf %713, %715 : vector<8x128xf32>
    %c0_199 = arith.constant 0 : index
    %c0_200 = arith.constant 0 : index
    %717 = vector.load %arg2[%c0_199, %c0_200] : memref<544x32xf32, #tpu.memory_space<vmem>>, vector<128x32xf32>
    %cst_201 = arith.constant dense<0.000000e+00> : vector<8x32xf32>
    %718 = tpu.matmul %716, %717, %cst_201 {dimension_numbers = #tpu.dot_dimension_numbers<[1], [0], [0], [1], [0, 0, 1, 1], [], []>} : vector<8x128xf32>, vector<128x32xf32>, vector<8x32xf32> -> vector<8x32xf32>
    %c128 = arith.constant 128 : index
    %c0_202 = arith.constant 0 : index
    %719 = vector.load %arg2[%c128, %c0_202] : memref<544x32xf32, #tpu.memory_space<vmem>>, vector<1x32xf32>
    %720 = vector.broadcast %719 : vector<1x32xf32> to vector<8x32xf32>
    %721 = arith.addf %718, %720 : vector<8x32xf32>
    %722 = math.tanh %721 : vector<8x32xf32>
    %c0_203 = arith.constant 0 : index
    %c0_204 = arith.constant 0 : index
    %723 = vector.load %arg3[%c0_203, %c0_204] : memref<160x256xf32, #tpu.memory_space<vmem>>, vector<32x256xf32>
    %cst_205 = arith.constant dense<0.000000e+00> : vector<8x256xf32>
    %724 = tpu.matmul %722, %723, %cst_205 {dimension_numbers = #tpu.dot_dimension_numbers<[1], [0], [0], [1], [0, 0, 1, 1], [], []>} : vector<8x32xf32>, vector<32x256xf32>, vector<8x256xf32> -> vector<8x256xf32>
    %c32 = arith.constant 32 : index
    %c0_206 = arith.constant 0 : index
    %725 = vector.load %arg3[%c32, %c0_206] : memref<160x256xf32, #tpu.memory_space<vmem>>, vector<1x256xf32>
    %726 = vector.broadcast %725 : vector<1x256xf32> to vector<8x256xf32>
    %727 = arith.addf %724, %726 : vector<8x256xf32>
    %728 = vector.extract_strided_slice %727 {offsets = [0, 0], sizes = [8, 128], strides = [1, 1]} : vector<8x256xf32> to vector<8x128xf32>
    %729 = math.tanh %728 : vector<8x128xf32>
    %730 = vector.extract_strided_slice %727 {offsets = [0, 128], sizes = [8, 128], strides = [1, 1]} : vector<8x256xf32> to vector<8x128xf32>
    %c3_i32_207 = arith.constant 3 : i32
    %731 = vector.broadcast %c3_i32_207 : i32 to vector<8x128xi32>
    %732 = arith.cmpi sge, %1, %731 : vector<8x128xi32>
    %c6_i32 = arith.constant 6 : i32
    %733 = vector.broadcast %c6_i32 : i32 to vector<8x128xi32>
    %734 = arith.cmpi slt, %1, %733 : vector<8x128xi32>
    %735 = arith.andi %732, %734 : vector<8x128xi1>
    %736 = arith.subf %716, %730 : vector<8x128xf32>
    %cst_208 = arith.constant 0.000000e+00 : f32
    %737 = vector.broadcast %cst_208 : f32 to vector<8x128xf32>
    %738 = arith.subf %737, %729 : vector<8x128xf32>
    %739 = math.exp %738 : vector<8x128xf32>
    %740 = arith.mulf %736, %739 : vector<8x128xf32>
    %741 = arith.select %735, %740, %716 : vector<8x128xi1>, vector<8x128xf32>
    %c136_209 = arith.constant 136 : index
    %c0_210 = arith.constant 0 : index
    %742 = vector.load %arg1[%c136_209, %c0_210] : memref<416x128xf32, #tpu.memory_space<vmem>>, vector<1x128xf32>
    %743 = vector.broadcast %742 : vector<1x128xf32> to vector<8x128xf32>
    %744 = arith.subf %741, %743 : vector<8x128xf32>
    %c128_211 = arith.constant 128 : index
    %c0_212 = arith.constant 0 : index
    %745 = vector.load %arg1[%c128_211, %c0_212] : memref<416x128xf32, #tpu.memory_space<vmem>>, vector<1x128xf32>
    %746 = vector.broadcast %745 : vector<1x128xf32> to vector<8x128xf32>
    %747 = arith.mulf %744, %746 : vector<8x128xf32>
    %c0_213 = arith.constant 0 : index
    %c0_214 = arith.constant 0 : index
    %748 = vector.load %arg1[%c0_213, %c0_214] : memref<416x128xf32, #tpu.memory_space<vmem>>, vector<128x128xf32>
    %cst_215 = arith.constant dense<0.000000e+00> : vector<8x128xf32>
    %749 = tpu.matmul %747, %748, %cst_215 {dimension_numbers = #tpu.dot_dimension_numbers<[1], [0], [0], [1], [0, 0, 1, 1], [], []>} : vector<8x128xf32>, vector<128x128xf32>, vector<8x128xf32> -> vector<8x128xf32>
    %c0_216 = arith.constant 0 : index
    %c0_217 = arith.constant 0 : index
    %750 = vector.load %arg4[%c0_216, %c0_217] : memref<8x128xf32, #tpu.memory_space<vmem>>, vector<8x128xf32>
    tpu.vector_store %arg4[%c0_216, %c0_217], %749 {strides = array<i32>} : memref<8x128xf32, #tpu.memory_space<vmem>>, vector<8x128xf32>,
    return
  }
}

</mosaic_0001>

<llo_original>
// kernel: tpu_custom_call.1
$region0: #{tpu_custom_call.1}
  #allocation0 [shape = 'u32[]', space=smem, size = 0x4, offset = 0x4, fixed_abs, tag = 'smem constant byte address 0x4 - core index']
  #allocation1 [shape = 'u32[72,128]{1,0:T(1,128)}', space=vmem, size = 0x9000, scoped, tag = 'internal scratch']
  %s0 = inlined_call_operand.vmem [shape: f32[8,128], index: 0, kind: input, shape index: {}]
  %s1 = inlined_call_operand.vmem [shape: f32[416,128], index: 1, kind: input, shape index: {}]
  %s2 = inlined_call_operand.vmem [shape: f32[544,32], index: 2, kind: input, shape index: {}]
  %s3 = inlined_call_operand.hbm [shape: f32[160,256], index: 3, kind: input, shape index: {}]
  %s4 = inlined_call_operand.hbm [shape: f32[8,128], index: 4, kind: output, shape index: {}]
  %s5 = sld [smem:[#allocation0]]
  $region30: #{tpu_custom_call.1} parent=0
    _
  %s7 = ssub.s32 1, %s5
  %s8 = scalar_select 0, %s7, %s5
  $region1: #{tpu_custom_call.1} parent=0
    #allocation2 [shape = 'u8[163840]{0}', space=vmem, size = 0x28000, scoped, tag = 'input window, operand 3, single buffered']
    #allocation3 [shape = 's32[1]{0}', space=sflag, size = 0x4, scoped, tag = 'scoped memory for tpu_custom_call.1']
    #allocation4 [shape = 's32[1]{0}', space=sflag, size = 0x4, scoped, tag = 'scoped memory for tpu_custom_call.1']
    #allocation5 [shape = 'u8[4096]{0}', space=vmem, size = 0x1000, scoped, tag = 'output window, operand 0, single buffered']
    %9 = vsyncpa [#allocation3], 0
    %10 = vsyncpa [#allocation4], 0
    // Predicated region
    $region2: #{tpu_custom_call.1} parent=1 // pred_check
      _
    $region3: #{tpu_custom_call.1} parent=1 // pred_check_branch
      %12 = sbr.rel (0) target = $region5
    $region4: #{tpu_custom_call.1} parent=1 // pred_region
      _
    $region5: #{tpu_custom_call.1} parent=1 // pred_fallthru
      _
    // Predicated region
    $region6: #{tpu_custom_call.1} parent=1 // pred_check
      _
    $region7: #{tpu_custom_call.1} parent=1 // pred_check_branch
      %14 = sbr.rel (0) target = $region9
    $region8: #{tpu_custom_call.1} parent=1 // pred_region
      _
    $region9: #{tpu_custom_call.1} parent=1 // pred_fallthru
      _
    // Predicated region
    $region10: #{tpu_custom_call.1} parent=1 // pred_check
      _
    $region11: #{tpu_custom_call.1} parent=1 // pred_check_branch
      %16 = sbr.rel (0) target = $region13
    $region12: #{tpu_custom_call.1} parent=1 // pred_region
      _
    $region13: #{tpu_custom_call.1} parent=1 // pred_fallthru
      _
    // Predicated region
    $region14: #{tpu_custom_call.1} parent=1 // pred_check
      _
    $region15: #{tpu_custom_call.1} parent=1 // pred_check_branch
      %18 = sbr.rel (0) target = $region17
    $region16: #{tpu_custom_call.1} parent=1 // pred_region
      %20 = vsyncadd [#allocation3], 0
      %s21 = sshll.u32 %s3, 4
      %s22 = int_to_ptr.hbm [resolvable:$true] %s21
      %s23 = sshll.u32 [#allocation2], 4
      %s24 = int_to_ptr.vmem [resolvable:$true] %s23
      %29 = dma.hbm_to_vmem [thread:$0]  %s22, 5120, %s24, [#allocation3], 256, 256, 16
    $region17: #{tpu_custom_call.1} parent=1 // pred_fallthru
      _
    // Predicated region
    $region18: #{tpu_custom_call.1} parent=1 // pred_check
      _
    $region19: #{tpu_custom_call.1} parent=1 // pred_check_branch
      %31 = sbr.rel (0) target = $region21
    $region20: #{tpu_custom_call.1} parent=1 // pred_region
      %33 = dma.done [#allocation3], 5120
    $region21: #{tpu_custom_call.1} parent=1 // pred_fallthru
      _
    %v34 = vld [vmem:[%s0] sm:$0xff]
    %v35 = vlaneseq
    %v36 = vand.u32 %v35, 127
    %v37 = vld [vmem:[%s1 + $0x120] sm:$0x1]
    %v38 = vld [vmem:[%s1 + $0x140] sm:$0x1]
    %v39 = vld [vmem:[%s1 + $0x160] sm:$0x1]
    %v40 = vld [vmem:[%s1 + $0x180] sm:$0x1]
    %v41 = vperm.slane %v37, 0
    %vm42 = vcmp.ge.f32.partialorder %v34, %v41
    %v43 = vperm.slane %v38, 0
    %vm44 = vcmp.lt.f32.partialorder %v34, %v43
    %vm45 = vmand %vm42, %vm44
    %v46 = vsub.f32 %v34, %v41
    %v47 = vperm.slane %v40, 0
    %v48 = vmul.f32 %v46, %v47
    %v49 = vperm.slane %v39, 0
    %v50 = vadd.f32 %v49, %v48
    %v51 = vsub.f32 %v50, %v34
    %v52 = vsel %vm45, %v51, 0.0
    %v53 = vld [vmem:[%s1 + $0x121] sm:$0x1]
    %v54 = vld [vmem:[%s1 + $0x141] sm:$0x1]
    %v55 = vld [vmem:[%s1 + $0x161] sm:$0x1]
    %v56 = vld [vmem:[%s1 + $0x181] sm:$0x1]
    %v57 = vperm.slane %v53, 0
    %vm58 = vcmp.ge.f32.partialorder %v34, %v57
    %v59 = vperm.slane %v54, 0
    %vm60 = vcmp.lt.f32.partialorder %v34, %v59
    %vm61 = vmand %vm58, %vm60
    %v62 = vsub.f32 %v34, %v57
    %v63 = vperm.slane %v56, 0
    %v64 = vmul.f32 %v62, %v63
    %v65 = vperm.slane %v55, 0
    %v66 = vadd.f32 %v65, %v64
    %v67 = vsub.f32 %v66, %v34
    %v68 = vsel %vm61, %v67, 0.0
    %v69 = vld [vmem:[%s1 + $0x122] sm:$0x1]
    %v70 = vld [vmem:[%s1 + $0x142] sm:$0x1]
    %v71 = vld [vmem:[%s1 + $0x162] sm:$0x1]
    %v72 = vld [vmem:[%s1 + $0x182] sm:$0x1]
    %v73 = vperm.slane %v69, 0
    %vm74 = vcmp.ge.f32.partialorder %v34, %v73
    %v75 = vperm.slane %v70, 0
    %vm76 = vcmp.lt.f32.partialorder %v34, %v75
    %vm77 = vmand %vm74, %vm76
    %v78 = vsub.f32 %v34, %v73
    %v79 = vperm.slane %v72, 0
    %v80 = vmul.f32 %v78, %v79
    %v81 = vperm.slane %v71, 0
    %v82 = vadd.f32 %v81, %v80
    %v83 = vsub.f32 %v82, %v34
    %v84 = vsel %vm77, %v83, 0.0
    %v85 = vld [vmem:[%s1 + $0x123] sm:$0x1]
    %v86 = vld [vmem:[%s1 + $0x143] sm:$0x1]
    %v87 = vld [vmem:[%s1 + $0x163] sm:$0x1]
    %v88 = vld [vmem:[%s1 + $0x183] sm:$0x1]
    %v89 = vperm.slane %v85, 0
    %vm90 = vcmp.ge.f32.partialorder %v34, %v89
    %v91 = vperm.slane %v86, 0
    %vm92 = vcmp.lt.f32.partialorder %v34, %v91
    %vm93 = vmand %vm90, %vm92
    %v94 = vsub.f32 %v34, %v89
    %v95 = vperm.slane %v88, 0
    %v96 = vmul.f32 %v94, %v95
    %v97 = vperm.slane %v87, 0
    %v98 = vadd.f32 %v97, %v96
    %v99 = vsub.f32 %v98, %v34
    %v100 = vsel %vm93, %v99, 0.0
    %v101 = vld [vmem:[%s1 + $0x124] sm:$0x1]
    %v102 = vld [vmem:[%s1 + $0x144] sm:$0x1]
    %v103 = vld [vmem:[%s1 + $0x164] sm:$0x1]
    %v104 = vld [vmem:[%s1 + $0x184] sm:$0x1]
    %v105 = vperm.slane %v101, 0
    %vm106 = vcmp.ge.f32.partialorder %v34, %v105
    %v107 = vperm.slane %v102, 0
    %vm108 = vcmp.lt.f32.partialorder %v34, %v107
    %vm109 = vmand %vm106, %vm108
    %v110 = vsub.f32 %v34, %v105
    %v111 = vperm.slane %v104, 0
    %v112 = vmul.f32 %v110, %v111
    %v113 = vperm.slane %v103, 0
    %v114 = vadd.f32 %v113, %v112
    %v115 = vsub.f32 %v114, %v34
    %v116 = vsel %vm109, %v115, 0.0
    %v117 = vld [vmem:[%s1 + $0x125] sm:$0x1]
    %v118 = vld [vmem:[%s1 + $0x145] sm:$0x1]
    %v119 = vld [vmem:[%s1 + $0x165] sm:$0x1]
    %v120 = vld [vmem:[%s1 + $0x185] sm:$0x1]
    %v121 = vperm.slane %v117, 0
    %vm122 = vcmp.ge.f32.partialorder %v34, %v121
    %v123 = vperm.slane %v118, 0
    %vm124 = vcmp.lt.f32.partialorder %v34, %v123
    %vm125 = vmand %vm122, %vm124
    %v126 = vsub.f32 %v34, %v121
    %v127 = vperm.slane %v120, 0
    %v128 = vmul.f32 %v126, %v127
    %v129 = vperm.slane %v119, 0
    %v130 = vadd.f32 %v129, %v128
    %v131 = vsub.f32 %v130, %v34
    %v132 = vsel %vm125, %v131, 0.0
    %v133 = vld [vmem:[%s1 + $0x126] sm:$0x1]
    %v134 = vld [vmem:[%s1 + $0x146] sm:$0x1]
    %v135 = vld [vmem:[%s1 + $0x166] sm:$0x1]
    %v136 = vld [vmem:[%s1 + $0x186] sm:$0x1]
    %v137 = vperm.slane %v133, 0
    %vm138 = vcmp.ge.f32.partialorder %v34, %v137
    %v139 = vperm.slane %v134, 0
    %vm140 = vcmp.lt.f32.partialorder %v34, %v139
    %vm141 = vmand %vm138, %vm140
    %v142 = vsub.f32 %v34, %v137
    %v143 = vperm.slane %v136, 0
    %v144 = vmul.f32 %v142, %v143
    %v145 = vperm.slane %v135, 0
    %v146 = vadd.f32 %v145, %v144
    %v147 = vsub.f32 %v146, %v34
    %v148 = vsel %vm141, %v147, 0.0
    %v149 = vld [vmem:[%s1 + $0x127] sm:$0x1]
    %v150 = vld [vmem:[%s1 + $0x147] sm:$0x1]
    %v151 = vld [vmem:[%s1 + $0x167] sm:$0x1]
    %v152 = vld [vmem:[%s1 + $0x187] sm:$0x1]
    %v153 = vperm.slane %v149, 0
    %vm154 = vcmp.ge.f32.partialorder %v34, %v153
    %v155 = vperm.slane %v150, 0
    %vm156 = vcmp.lt.f32.partialorder %v34, %v155
    %vm157 = vmand %vm154, %vm156
    %v158 = vsub.f32 %v34, %v153
    %v159 = vperm.slane %v152, 0
    %v160 = vmul.f32 %v158, %v159
    %v161 = vperm.slane %v151, 0
    %v162 = vadd.f32 %v161, %v160
    %v163 = vsub.f32 %v162, %v34
    %v164 = vsel %vm157, %v163, 0.0
    %v165 = vld [vmem:[%s1 + $0x128] sm:$0x1]
    %v166 = vld [vmem:[%s1 + $0x148] sm:$0x1]
    %v167 = vld [vmem:[%s1 + $0x168] sm:$0x1]
    %v168 = vld [vmem:[%s1 + $0x188] sm:$0x1]
    %v169 = vperm.slane %v165, 0
    %vm170 = vcmp.ge.f32.partialorder %v34, %v169
    %v171 = vperm.slane %v166, 0
    %vm172 = vcmp.lt.f32.partialorder %v34, %v171
    %vm173 = vmand %vm170, %vm172
    %v174 = vsub.f32 %v34, %v169
    %v175 = vperm.slane %v168, 0
    %v176 = vmul.f32 %v174, %v175
    %v177 = vperm.slane %v167, 0
    %v178 = vadd.f32 %v177, %v176
    %v179 = vsub.f32 %v178, %v34
    %v180 = vsel %vm173, %v179, 0.0
    %v181 = vld [vmem:[%s1 + $0x129] sm:$0x1]
    %v182 = vld [vmem:[%s1 + $0x149] sm:$0x1]
    %v183 = vld [vmem:[%s1 + $0x169] sm:$0x1]
    %v184 = vld [vmem:[%s1 + $0x189] sm:$0x1]
    %v185 = vperm.slane %v181, 0
    %vm186 = vcmp.ge.f32.partialorder %v34, %v185
    %v187 = vperm.slane %v182, 0
    %vm188 = vcmp.lt.f32.partialorder %v34, %v187
    %vm189 = vmand %vm186, %vm188
    %v190 = vsub.f32 %v34, %v185
    %v191 = vperm.slane %v184, 0
    %v192 = vmul.f32 %v190, %v191
    %v193 = vperm.slane %v183, 0
    %v194 = vadd.f32 %v193, %v192
    %v195 = vsub.f32 %v194, %v34
    %v196 = vsel %vm189, %v195, 0.0
    %v197 = vld [vmem:[%s1 + $0x12a] sm:$0x1]
    %v198 = vld [vmem:[%s1 + $0x14a] sm:$0x1]
    %v199 = vld [vmem:[%s1 + $0x16a] sm:$0x1]
    %v200 = vld [vmem:[%s1 + $0x18a] sm:$0x1]
    %v201 = vperm.slane %v197, 0
    %vm202 = vcmp.ge.f32.partialorder %v34, %v201
    %v203 = vperm.slane %v198, 0
    %vm204 = vcmp.lt.f32.partialorder %v34, %v203
    %vm205 = vmand %vm202, %vm204
    %v206 = vsub.f32 %v34, %v201
    %v207 = vperm.slane %v200, 0
    %v208 = vmul.f32 %v206, %v207
    %v209 = vperm.slane %v199, 0
    %v210 = vadd.f32 %v209, %v208
    %v211 = vsub.f32 %v210, %v34
    %v212 = vsel %vm205, %v211, 0.0
    %v213 = vld [vmem:[%s1 + $0x12b] sm:$0x1]
    %v214 = vld [vmem:[%s1 + $0x14b] sm:$0x1]
    %v215 = vld [vmem:[%s1 + $0x16b] sm:$0x1]
    %v216 = vld [vmem:[%s1 + $0x18b] sm:$0x1]
    %v217 = vperm.slane %v213, 0
    %vm218 = vcmp.ge.f32.partialorder %v34, %v217
    %v219 = vperm.slane %v214, 0
    %vm220 = vcmp.lt.f32.partialorder %v34, %v219
    %vm221 = vmand %vm218, %vm220
    %v222 = vsub.f32 %v34, %v217
    %v223 = vperm.slane %v216, 0
    %v224 = vmul.f32 %v222, %v223
    %v225 = vperm.slane %v215, 0
    %v226 = vadd.f32 %v225, %v224
    %v227 = vsub.f32 %v226, %v34
    %v228 = vsel %vm221, %v227, 0.0
    %v229 = vld [vmem:[%s1 + $0x12c] sm:$0x1]
    %v230 = vld [vmem:[%s1 + $0x14c] sm:$0x1]
    %v231 = vld [vmem:[%s1 + $0x16c] sm:$0x1]
    %v232 = vld [vmem:[%s1 + $0x18c] sm:$0x1]
    %v233 = vperm.slane %v229, 0
    %vm234 = vcmp.ge.f32.partialorder %v34, %v233
    %v235 = vperm.slane %v230, 0
    %vm236 = vcmp.lt.f32.partialorder %v34, %v235
    %vm237 = vmand %vm234, %vm236
    %v238 = vsub.f32 %v34, %v233
    %v239 = vperm.slane %v232, 0
    %v240 = vmul.f32 %v238, %v239
    %v241 = vperm.slane %v231, 0
    %v242 = vadd.f32 %v241, %v240
    %v243 = vsub.f32 %v242, %v34
    %v244 = vsel %vm237, %v243, 0.0
    %v245 = vld [vmem:[%s1 + $0x12d] sm:$0x1]
    %v246 = vld [vmem:[%s1 + $0x14d] sm:$0x1]
    %v247 = vld [vmem:[%s1 + $0x16d] sm:$0x1]
    %v248 = vld [vmem:[%s1 + $0x18d] sm:$0x1]
    %v249 = vperm.slane %v245, 0
    %vm250 = vcmp.ge.f32.partialorder %v34, %v249
    %v251 = vperm.slane %v246, 0
    %vm252 = vcmp.lt.f32.partialorder %v34, %v251
    %vm253 = vmand %vm250, %vm252
    %v254 = vsub.f32 %v34, %v249
    %v255 = vperm.slane %v248, 0
    %v256 = vmul.f32 %v254, %v255
    %v257 = vperm.slane %v247, 0
    %v258 = vadd.f32 %v257, %v256
    %v259 = vsub.f32 %v258, %v34
    %v260 = vsel %vm253, %v259, 0.0
    %v261 = vld [vmem:[%s1 + $0x12e] sm:$0x1]
    %v262 = vld [vmem:[%s1 + $0x14e] sm:$0x1]
    %v263 = vld [vmem:[%s1 + $0x16e] sm:$0x1]
    %v264 = vld [vmem:[%s1 + $0x18e] sm:$0x1]
    %v265 = vperm.slane %v261, 0
    %vm266 = vcmp.ge.f32.partialorder %v34, %v265
    %v267 = vperm.slane %v262, 0
    %vm268 = vcmp.lt.f32.partialorder %v34, %v267
    %vm269 = vmand %vm266, %vm268
    %v270 = vsub.f32 %v34, %v265
    %v271 = vperm.slane %v264, 0
    %v272 = vmul.f32 %v270, %v271
    %v273 = vperm.slane %v263, 0
    %v274 = vadd.f32 %v273, %v272
    %v275 = vsub.f32 %v274, %v34
    %v276 = vsel %vm269, %v275, 0.0
    %v277 = vld [vmem:[%s1 + $0x12f] sm:$0x1]
    %v278 = vld [vmem:[%s1 + $0x14f] sm:$0x1]
    %v279 = vld [vmem:[%s1 + $0x16f] sm:$0x1]
    %v280 = vld [vmem:[%s1 + $0x18f] sm:$0x1]
    %v281 = vperm.slane %v277, 0
    %vm282 = vcmp.ge.f32.partialorder %v34, %v281
    %v283 = vperm.slane %v278, 0
    %vm284 = vcmp.lt.f32.partialorder %v34, %v283
    %vm285 = vmand %vm282, %vm284
    %v286 = vsub.f32 %v34, %v281
    %v287 = vperm.slane %v280, 0
    %v288 = vmul.f32 %v286, %v287
    %v289 = vperm.slane %v279, 0
    %v290 = vadd.f32 %v289, %v288
    %v291 = vsub.f32 %v290, %v34
    %v292 = vsel %vm285, %v291, 0.0
    %v293 = vld [vmem:[%s1 + $0x130] sm:$0x1]
    %v294 = vld [vmem:[%s1 + $0x150] sm:$0x1]
    %v295 = vld [vmem:[%s1 + $0x170] sm:$0x1]
    %v296 = vld [vmem:[%s1 + $0x190] sm:$0x1]
    %v297 = vperm.slane %v293, 0
    %vm298 = vcmp.ge.f32.partialorder %v34, %v297
    %v299 = vperm.slane %v294, 0
    %vm300 = vcmp.lt.f32.partialorder %v34, %v299
    %vm301 = vmand %vm298, %vm300
    %v302 = vsub.f32 %v34, %v297
    %v303 = vperm.slane %v296, 0
    %v304 = vmul.f32 %v302, %v303
    %v305 = vperm.slane %v295, 0
    %v306 = vadd.f32 %v305, %v304
    %v307 = vsub.f32 %v306, %v34
    %v308 = vsel %vm301, %v307, 0.0
    %v309 = vld [vmem:[%s1 + $0x131] sm:$0x1]
    %v310 = vld [vmem:[%s1 + $0x151] sm:$0x1]
    %v311 = vld [vmem:[%s1 + $0x171] sm:$0x1]
    %v312 = vld [vmem:[%s1 + $0x191] sm:$0x1]
    %v313 = vperm.slane %v309, 0
    %vm314 = vcmp.ge.f32.partialorder %v34, %v313
    %v315 = vperm.slane %v310, 0
    %vm316 = vcmp.lt.f32.partialorder %v34, %v315
    %vm317 = vmand %vm314, %vm316
    %v318 = vsub.f32 %v34, %v313
    %v319 = vperm.slane %v312, 0
    %v320 = vmul.f32 %v318, %v319
    %v321 = vperm.slane %v311, 0
    %v322 = vadd.f32 %v321, %v320
    %v323 = vsub.f32 %v322, %v34
    %v324 = vsel %vm317, %v323, 0.0
    %v325 = vld [vmem:[%s1 + $0x132] sm:$0x1]
    %v326 = vld [vmem:[%s1 + $0x152] sm:$0x1]
    %v327 = vld [vmem:[%s1 + $0x172] sm:$0x1]
    %v328 = vld [vmem:[%s1 + $0x192] sm:$0x1]
    %v329 = vperm.slane %v325, 0
    %vm330 = vcmp.ge.f32.partialorder %v34, %v329
    %v331 = vperm.slane %v326, 0
    %vm332 = vcmp.lt.f32.partialorder %v34, %v331
    %vm333 = vmand %vm330, %vm332
    %v334 = vsub.f32 %v34, %v329
    %v335 = vperm.slane %v328, 0
    %v336 = vmul.f32 %v334, %v335
    %v337 = vperm.slane %v327, 0
    %v338 = vadd.f32 %v337, %v336
    %v339 = vsub.f32 %v338, %v34
    %v340 = vsel %vm333, %v339, 0.0
    %v341 = vld [vmem:[%s1 + $0x133] sm:$0x1]
    %v342 = vld [vmem:[%s1 + $0x153] sm:$0x1]
    %v343 = vld [vmem:[%s1 + $0x173] sm:$0x1]
    %v344 = vld [vmem:[%s1 + $0x193] sm:$0x1]
    %v345 = vperm.slane %v341, 0
    %vm346 = vcmp.ge.f32.partialorder %v34, %v345
    %v347 = vperm.slane %v342, 0
    %vm348 = vcmp.lt.f32.partialorder %v34, %v347
    %vm349 = vmand %vm346, %vm348
    %v350 = vsub.f32 %v34, %v345
    %v351 = vperm.slane %v344, 0
    %v352 = vmul.f32 %v350, %v351
    %v353 = vperm.slane %v343, 0
    %v354 = vadd.f32 %v353, %v352
    %v355 = vsub.f32 %v354, %v34
    %v356 = vsel %vm349, %v355, 0.0
    %v357 = vld [vmem:[%s1 + $0x134] sm:$0x1]
    %v358 = vld [vmem:[%s1 + $0x154] sm:$0x1]
    %v359 = vld [vmem:[%s1 + $0x174] sm:$0x1]
    %v360 = vld [vmem:[%s1 + $0x194] sm:$0x1]
    %v361 = vperm.slane %v357, 0
    %vm362 = vcmp.ge.f32.partialorder %v34, %v361
    %v363 = vperm.slane %v358, 0
    %vm364 = vcmp.lt.f32.partialorder %v34, %v363
    %vm365 = vmand %vm362, %vm364
    %v366 = vsub.f32 %v34, %v361
    %v367 = vperm.slane %v360, 0
    %v368 = vmul.f32 %v366, %v367
    %v369 = vperm.slane %v359, 0
    %v370 = vadd.f32 %v369, %v368
    %v371 = vsub.f32 %v370, %v34
    %v372 = vsel %vm365, %v371, 0.0
    %v373 = vld [vmem:[%s1 + $0x135] sm:$0x1]
    %v374 = vld [vmem:[%s1 + $0x155] sm:$0x1]
    %v375 = vld [vmem:[%s1 + $0x175] sm:$0x1]
    %v376 = vld [vmem:[%s1 + $0x195] sm:$0x1]
    %v377 = vperm.slane %v373, 0
    %vm378 = vcmp.ge.f32.partialorder %v34, %v377
    %v379 = vperm.slane %v374, 0
    %vm380 = vcmp.lt.f32.partialorder %v34, %v379
    %vm381 = vmand %vm378, %vm380
    %v382 = vsub.f32 %v34, %v377
    %v383 = vperm.slane %v376, 0
    %v384 = vmul.f32 %v382, %v383
    %v385 = vperm.slane %v375, 0
    %v386 = vadd.f32 %v385, %v384
    %v387 = vsub.f32 %v386, %v34
    %v388 = vsel %vm381, %v387, 0.0
    %v389 = vld [vmem:[%s1 + $0x136] sm:$0x1]
    %v390 = vld [vmem:[%s1 + $0x156] sm:$0x1]
    %v391 = vld [vmem:[%s1 + $0x176] sm:$0x1]
    %v392 = vld [vmem:[%s1 + $0x196] sm:$0x1]
    %v393 = vperm.slane %v389, 0
    %vm394 = vcmp.ge.f32.partialorder %v34, %v393
    %v395 = vperm.slane %v390, 0
    %vm396 = vcmp.lt.f32.partialorder %v34, %v395
    %vm397 = vmand %vm394, %vm396
    %v398 = vsub.f32 %v34, %v393
    %v399 = vperm.slane %v392, 0
    %v400 = vmul.f32 %v398, %v399
    %v401 = vperm.slane %v391, 0
    %v402 = vadd.f32 %v401, %v400
    %v403 = vsub.f32 %v402, %v34
    %v404 = vsel %vm397, %v403, 0.0
    %v405 = vld [vmem:[%s1 + $0x137] sm:$0x1]
    %v406 = vld [vmem:[%s1 + $0x157] sm:$0x1]
    %v407 = vld [vmem:[%s1 + $0x177] sm:$0x1]
    %v408 = vld [vmem:[%s1 + $0x197] sm:$0x1]
    %v409 = vperm.slane %v405, 0
    %vm410 = vcmp.ge.f32.partialorder %v34, %v409
    %v411 = vperm.slane %v406, 0
    %vm412 = vcmp.lt.f32.partialorder %v34, %v411
    %vm413 = vmand %vm410, %vm412
    %v414 = vsub.f32 %v34, %v409
    %v415 = vperm.slane %v408, 0
    %v416 = vmul.f32 %v414, %v415
    %v417 = vperm.slane %v407, 0
    %v418 = vadd.f32 %v417, %v416
    %v419 = vsub.f32 %v418, %v34
    %v420 = vsel %vm413, %v419, 0.0
    %v421 = vld [vmem:[%s1 + $0x138] sm:$0x1]
    %v422 = vld [vmem:[%s1 + $0x158] sm:$0x1]
    %v423 = vld [vmem:[%s1 + $0x178] sm:$0x1]
    %v424 = vld [vmem:[%s1 + $0x198] sm:$0x1]
    %v425 = vperm.slane %v421, 0
    %vm426 = vcmp.ge.f32.partialorder %v34, %v425
    %v427 = vperm.slane %v422, 0
    %vm428 = vcmp.lt.f32.partialorder %v34, %v427
    %vm429 = vmand %vm426, %vm428
    %v430 = vsub.f32 %v34, %v425
    %v431 = vperm.slane %v424, 0
    %v432 = vmul.f32 %v430, %v431
    %v433 = vperm.slane %v423, 0
    %v434 = vadd.f32 %v433, %v432
    %v435 = vsub.f32 %v434, %v34
    %v436 = vsel %vm429, %v435, 0.0
    %v437 = vld [vmem:[%s1 + $0x139] sm:$0x1]
    %v438 = vld [vmem:[%s1 + $0x159] sm:$0x1]
    %v439 = vld [vmem:[%s1 + $0x179] sm:$0x1]
    %v440 = vld [vmem:[%s1 + $0x199] sm:$0x1]
    %v441 = vperm.slane %v437, 0
    %vm442 = vcmp.ge.f32.partialorder %v34, %v441
    %v443 = vperm.slane %v438, 0
    %vm444 = vcmp.lt.f32.partialorder %v34, %v443
    %vm445 = vmand %vm442, %vm444
    %v446 = vsub.f32 %v34, %v441
    %v447 = vperm.slane %v440, 0
    %v448 = vmul.f32 %v446, %v447
    %v449 = vperm.slane %v439, 0
    %v450 = vadd.f32 %v449, %v448
    %v451 = vsub.f32 %v450, %v34
    %v452 = vsel %vm445, %v451, 0.0
    %v453 = vld [vmem:[%s1 + $0x13a] sm:$0x1]
    %v454 = vld [vmem:[%s1 + $0x15a] sm:$0x1]
    %v455 = vld [vmem:[%s1 + $0x17a] sm:$0x1]
    %v456 = vld [vmem:[%s1 + $0x19a] sm:$0x1]
    %v457 = vperm.slane %v453, 0
    %vm458 = vcmp.ge.f32.partialorder %v34, %v457
    %v459 = vperm.slane %v454, 0
    %vm460 = vcmp.lt.f32.partialorder %v34, %v459
    %vm461 = vmand %vm458, %vm460
    %v462 = vsub.f32 %v34, %v457
    %v463 = vperm.slane %v456, 0
    %v464 = vmul.f32 %v462, %v463
    %v465 = vperm.slane %v455, 0
    %v466 = vadd.f32 %v465, %v464
    %v467 = vsub.f32 %v466, %v34
    %v468 = vsel %vm461, %v467, 0.0
    %v469 = vld [vmem:[%s1 + $0x13b] sm:$0x1]
    %v470 = vld [vmem:[%s1 + $0x15b] sm:$0x1]
    %v471 = vld [vmem:[%s1 + $0x17b] sm:$0x1]
    %v472 = vld [vmem:[%s1 + $0x19b] sm:$0x1]
    %v473 = vperm.slane %v469, 0
    %vm474 = vcmp.ge.f32.partialorder %v34, %v473
    %v475 = vperm.slane %v470, 0
    %vm476 = vcmp.lt.f32.partialorder %v34, %v475
    %vm477 = vmand %vm474, %vm476
    %v478 = vsub.f32 %v34, %v473
    %v479 = vperm.slane %v472, 0
    %v480 = vmul.f32 %v478, %v479
    %v481 = vperm.slane %v471, 0
    %v482 = vadd.f32 %v481, %v480
    %v483 = vsub.f32 %v482, %v34
    %v484 = vsel %vm477, %v483, 0.0
    %v485 = vld [vmem:[%s1 + $0x13c] sm:$0x1]
    %v486 = vld [vmem:[%s1 + $0x15c] sm:$0x1]
    %v487 = vld [vmem:[%s1 + $0x17c] sm:$0x1]
    %v488 = vld [vmem:[%s1 + $0x19c] sm:$0x1]
    %v489 = vperm.slane %v485, 0
    %vm490 = vcmp.ge.f32.partialorder %v34, %v489
    %v491 = vperm.slane %v486, 0
    %vm492 = vcmp.lt.f32.partialorder %v34, %v491
    %vm493 = vmand %vm490, %vm492
    %v494 = vsub.f32 %v34, %v489
    %v495 = vperm.slane %v488, 0
    %v496 = vmul.f32 %v494, %v495
    %v497 = vperm.slane %v487, 0
    %v498 = vadd.f32 %v497, %v496
    %v499 = vsub.f32 %v498, %v34
    %v500 = vsel %vm493, %v499, 0.0
    %v501 = vld [vmem:[%s1 + $0x13d] sm:$0x1]
    %v502 = vld [vmem:[%s1 + $0x15d] sm:$0x1]
    %v503 = vld [vmem:[%s1 + $0x17d] sm:$0x1]
    %v504 = vld [vmem:[%s1 + $0x19d] sm:$0x1]
    %v505 = vperm.slane %v501, 0
    %vm506 = vcmp.ge.f32.partialorder %v34, %v505
    %v507 = vperm.slane %v502, 0
    %vm508 = vcmp.lt.f32.partialorder %v34, %v507
    %vm509 = vmand %vm506, %vm508
    %v510 = vsub.f32 %v34, %v505
    %v511 = vperm.slane %v504, 0
    %v512 = vmul.f32 %v510, %v511
    %v513 = vperm.slane %v503, 0
    %v514 = vadd.f32 %v513, %v512
    %v515 = vsub.f32 %v514, %v34
    %v516 = vsel %vm509, %v515, 0.0
    %v517 = vadd.f32 %v52, %v68
    %v518 = vadd.f32 %v84, %v100
    %v519 = vadd.f32 %v116, %v132
    %v520 = vadd.f32 %v148, %v164
    %v521 = vadd.f32 %v180, %v196
    %v522 = vadd.f32 %v212, %v228
    %v523 = vadd.f32 %v244, %v260
    %v524 = vadd.f32 %v276, %v292
    %v525 = vadd.f32 %v308, %v324
    %v526 = vadd.f32 %v340, %v356
    %v527 = vadd.f32 %v372, %v388
    %v528 = vadd.f32 %v404, %v420
    %v529 = vadd.f32 %v436, %v452
    %v530 = vadd.f32 %v468, %v484
    %v531 = vadd.f32 %v500, %v516
    %v532 = vadd.f32 %v517, %v518
    %v533 = vadd.f32 %v519, %v520
    %v534 = vadd.f32 %v521, %v522
    %v535 = vadd.f32 %v523, %v524
    %v536 = vadd.f32 %v525, %v526
    %v537 = vadd.f32 %v527, %v528
    %v538 = vadd.f32 %v529, %v530
    %v539 = vadd.f32 %v532, %v533
    %v540 = vadd.f32 %v534, %v535
    %v541 = vadd.f32 %v536, %v537
    %v542 = vadd.f32 %v538, %v531
    %v543 = vadd.f32 %v539, %v540
    %v544 = vadd.f32 %v541, %v542
    %v545 = vadd.f32 %v543, %v544
    %v546 = vadd.f32 %v34, %v545
    %vm547 = vcmp.lt.s32.totalorder %v36, 4
    %v548 = vsel %vm547, %v546, 0.0
    %549 = vadd.xlane.f32.xlu0 %v548
    %v550 = vpop.xlane.xlu0 %549
    %v551 = vrcp.pop 4.0
    %v552 = vmul.f32 4.0, %v551
    %v553 = vsub.f32 1.0, %v552
    %v554 = vmul.f32 %v551, %v553
    %v555 = vadd.f32 %v551, %v554
    %vm556 = vweird.f32 %v551
    %v557 = vsel %vm556, %v551, %v555
    %v558 = vmul.f32 %v550, %v557
    %v559 = vsub.f32 %v546, %v558
    %v560 = vsel %vm547, %v559, 0.0
    %v561 = vmul.f32 %v560, %v560
    %562 = vadd.xlane.f32.xlu0 %v561
    %v563 = vpop.xlane.xlu0 %562
    %v564 = vrcp.pop 3.0
    %v565 = vmul.f32 3.0, %v564
    %v566 = vsub.f32 1.0, %v565
    %v567 = vmul.f32 %v564, %v566
    %v568 = vadd.f32 %v564, %v567
    %vm569 = vweird.f32 %v564
    %v570 = vsel %vm569, %v564, %v568
    %v571 = vmul.f32 %v563, %v570
    %v572 = vrsqrt.pop %v571
    %v573 = vmul.f32 %v572, %v571
    %v574 = vmul.f32 %v573, %v572
    %v575 = vmul.f32 0.5, %v574
    %v576 = vsub.f32 1.5, %v575
    %v577 = vmul.f32 %v572, %v576
    %v578 = vmul.f32 %v571, %v577
    %vm579 = vcmp.eq.f32.partialorder %v571, inf
    %v580 = vsel %vm579, %v571, %v578
    %vm581 = vcmp.eq.f32.partialorder %v571, 0.0
    %v582 = vand.u32 %v571, 2147483648
    %v583 = vsel %vm581, %v582, %v580
    %vm584 = vcmp.eq.s32.totalorder %v36, 4
    %v585 = vmul.f32 %v583, %v546
    %v586 = vadd.f32 %v585, %v558
    %v587 = vsel %vm584, %v586, %v546
    %v588 = vld [vmem:[%s2 + $0x198] sm:$0xff]
    %v589 = vld [vmem:[%s2 + $0x1a0] sm:$0xff]
    %v590 = vld [vmem:[%s2 + $0x1a8] sm:$0xff]
    %v591 = vld [vmem:[%s2 + $0x1b0] sm:$0xff]
    %v592 = vld [vmem:[%s2 + $0x1b8] sm:$0xff]
    %v593 = vld [vmem:[%s2 + $0x1c0] sm:$0xff]
    %v594 = vld [vmem:[%s2 + $0x1c8] sm:$0xff]
    %v595 = vld [vmem:[%s2 + $0x1d0] sm:$0xff]
    %v596 = vld [vmem:[%s2 + $0x1d8] sm:$0xff]
    %v597 = vld [vmem:[%s2 + $0x1e0] sm:$0xff]
    %v598 = vld [vmem:[%s2 + $0x1e8] sm:$0xff]
    %v599 = vld [vmem:[%s2 + $0x1f0] sm:$0xff]
    %v600 = vld [vmem:[%s2 + $0x1f8] sm:$0xff]
    %v601 = vld [vmem:[%s2 + $0x200] sm:$0xff]
    %v602 = vld [vmem:[%s2 + $0x208] sm:$0xff]
    %v603 = vld [vmem:[%s2 + $0x210] sm:$0xff]
    %v604 = vld [vmem:[%s2 + $0x218] sm:$0x1]
    %v605 = vperm.slane %v604, 0
    %606 = vmatpush.msra.mxu0 %v603
    %607 = vmatpush.msra.mxu0 %v602
    %608 = vmatpush.msra.mxu0 %v601
    %609 = vmatpush.msra.mxu0 %v600
    %610 = vmatpush.msra.mxu0 %v599
    %611 = vmatpush.msra.mxu0 %v598
    %612 = vmatpush.msra.mxu0 %v597
    %613 = vmatpush.msra.mxu0 %v596
    %614 = vmatpush.msra.mxu0 %v595
    %615 = vmatpush.msra.mxu0 %v594
    %616 = vmatpush.msra.mxu0 %v593
    %617 = vmatpush.msra.mxu0 %v592
    %618 = vmatpush.msra.mxu0 %v591
    %619 = vmatpush.msra.mxu0 %v590
    %620 = vmatpush.msra.mxu0 %v589
    %621 = vmatpush.msra.mxu0 %v588
    %622 = vmatmul.f32.gmra.mxu0 %v587
    %v623 = vpop.f32.mrf.mxu0
    %v624 = vadd.f32 %v605, %v623
    %625 = vdwg.mxu0
    %v626 = vtanh.pop %v624
    %v627 = vld [vmem:[#allocation2 + $0xf0] sm:$0xff]
    %v628 = vld [vmem:[#allocation2 + $0xf8] sm:$0xff]
    %v629 = vld [vmem:[#allocation2 + $0x100] sm:$0xff]
    %v630 = vld [vmem:[#allocation2 + $0x108] sm:$0xff]
    %v631 = vld [vmem:[#allocation2 + $0x110] sm:$0xff]
    %v632 = vld [vmem:[#allocation2 + $0x118] sm:$0xff]
    %v633 = vld [vmem:[#allocation2 + $0x120] sm:$0xff]
    %v634 = vld [vmem:[#allocation2 + $0x128] sm:$0xff]
    %s635 = scalar_lea.vmem [#allocation2], 304
    %v636 = vld [vmem:[%s635] ss:$8 sm:$0x3]
    %v638 = vperm.slane %v636, 0
    %v639 = vperm.slane %v636, 1
    %vm642 = vcmask 261120
    %v644 = vsel %vm642, %v626, 0
    %646 = vmatpush.msra.mxu0 0.0
    %647 = vmatpush.msra.mxu0 0.0
    %648 = vmatpush.msra.mxu0 0.0
    %649 = vmatpush.msra.mxu0 0.0
    %650 = vmatpush.msra.mxu0 0.0
    %651 = vmatpush.msra.mxu0 0.0
    %652 = vmatpush.msra.mxu0 0.0
    %653 = vmatpush.msra.mxu0 0.0
    %654 = vmatpush.msra.mxu0 0.0
    %655 = vmatpush.msra.mxu0 0.0
    %656 = vmatpush.msra.mxu0 0.0
    %657 = vmatpush.msra.mxu0 0.0
    %658 = vmatpush.msra.mxu0 %v633
    %659 = vmatpush.msra.mxu0 %v631
    %660 = vmatpush.msra.mxu0 %v629
    %661 = vmatpush.msra.mxu0 %v627
    %662 = vmatmul.f32.gmra.mxu0 %v644
    %v663 = vpop.f32.mrf.mxu0
    %v664 = vadd.f32 %v638, %v663
    %665 = vdwg.mxu0
    %666 = vmatpush.msra.mxu0 0.0
    %667 = vmatpush.msra.mxu0 0.0
    %668 = vmatpush.msra.mxu0 0.0
    %669 = vmatpush.msra.mxu0 0.0
    %670 = vmatpush.msra.mxu0 0.0
    %671 = vmatpush.msra.mxu0 0.0
    %672 = vmatpush.msra.mxu0 0.0
    %673 = vmatpush.msra.mxu0 0.0
    %674 = vmatpush.msra.mxu0 0.0
    %675 = vmatpush.msra.mxu0 0.0
    %676 = vmatpush.msra.mxu0 0.0
    %677 = vmatpush.msra.mxu0 0.0
    %678 = vmatpush.msra.mxu0 %v634
    %679 = vmatpush.msra.mxu0 %v632
    %680 = vmatpush.msra.mxu0 %v630
    %681 = vmatpush.msra.mxu0 %v628
    %682 = vmatmul.f32.gmra.mxu0 %v644
    %v683 = vpop.f32.mrf.mxu0
    %v684 = vadd.f32 %v639, %v683
    %685 = vdwg.mxu0
    %v686 = vtanh.pop %v664
    %vm687 = vcmp.ge.s32.totalorder %v36, 0
    %vm688 = vcmp.lt.s32.totalorder %v36, 2
    %vm689 = vmand %vm687, %vm688
    %v690 = vsub.f32 %v587, %v684
    %v691 = vsub.f32 0.0, %v686
    %v692 = vmul.f32 %v691, 1.442695
    %v693 = vpow.pop %v692
    %v694 = vmul.f32 %v690, %v693
    %v695 = vsel %vm689, %v694, %v587
    %v696 = vld [vmem:[%s1 + $0x119] sm:$0x1]
    %v697 = vperm.slane %v696, 0
    %v698 = vsub.f32 %v695, %v697
    %v699 = vld [vmem:[%s1 + $0x111] sm:$0x1]
    %v700 = vperm.slane %v699, 0
    %v701 = vmul.f32 %v698, %v700
    %v702 = vld [vmem:[%s2 + $0x110] sm:$0xff]
    %v703 = vld [vmem:[%s2 + $0x118] sm:$0xff]
    %v704 = vld [vmem:[%s2 + $0x120] sm:$0xff]
    %v705 = vld [vmem:[%s2 + $0x128] sm:$0xff]
    %v706 = vld [vmem:[%s2 + $0x130] sm:$0xff]
    %v707 = vld [vmem:[%s2 + $0x138] sm:$0xff]
    %v708 = vld [vmem:[%s2 + $0x140] sm:$0xff]
    %v709 = vld [vmem:[%s2 + $0x148] sm:$0xff]
    %v710 = vld [vmem:[%s2 + $0x150] sm:$0xff]
    %v711 = vld [vmem:[%s2 + $0x158] sm:$0xff]
    %v712 = vld [vmem:[%s2 + $0x160] sm:$0xff]
    %v713 = vld [vmem:[%s2 + $0x168] sm:$0xff]
    %v714 = vld [vmem:[%s2 + $0x170] sm:$0xff]
    %v715 = vld [vmem:[%s2 + $0x178] sm:$0xff]
    %v716 = vld [vmem:[%s2 + $0x180] sm:$0xff]
    %v717 = vld [vmem:[%s2 + $0x188] sm:$0xff]
    %v718 = vld [vmem:[%s2 + $0x190] sm:$0x1]
    %v719 = vperm.slane %v718, 0
    %720 = vmatpush.msra.mxu0 %v717
    %721 = vmatpush.msra.mxu0 %v716
    %722 = vmatpush.msra.mxu0 %v715
    %723 = vmatpush.msra.mxu0 %v714
    %724 = vmatpush.msra.mxu0 %v713
    %725 = vmatpush.msra.mxu0 %v712
    %726 = vmatpush.msra.mxu0 %v711
    %727 = vmatpush.msra.mxu0 %v710
    %728 = vmatpush.msra.mxu0 %v709
    %729 = vmatpush.msra.mxu0 %v708
    %730 = vmatpush.msra.mxu0 %v707
    %731 = vmatpush.msra.mxu0 %v706
    %732 = vmatpush.msra.mxu0 %v705
    %733 = vmatpush.msra.mxu0 %v704
    %734 = vmatpush.msra.mxu0 %v703
    %735 = vmatpush.msra.mxu0 %v702
    %736 = vmatmul.f32.gmra.mxu0 %v701
    %v737 = vpop.f32.mrf.mxu0
    %v738 = vadd.f32 %v719, %v737
    %739 = vdwg.mxu0
    %v740 = vtanh.pop %v738
    %v741 = vld [vmem:[#allocation2 + $0xa0] sm:$0xff]
    %v742 = vld [vmem:[#allocation2 + $0xa8] sm:$0xff]
    %v743 = vld [vmem:[#allocation2 + $0xb0] sm:$0xff]
    %v744 = vld [vmem:[#allocation2 + $0xb8] sm:$0xff]
    %v745 = vld [vmem:[#allocation2 + $0xc0] sm:$0xff]
    %v746 = vld [vmem:[#allocation2 + $0xc8] sm:$0xff]
    %v747 = vld [vmem:[#allocation2 + $0xd0] sm:$0xff]
    %v748 = vld [vmem:[#allocation2 + $0xd8] sm:$0xff]
    %s749 = scalar_lea.vmem [#allocation2], 224
    %v750 = vld [vmem:[%s749] ss:$8 sm:$0x3]
    %v752 = vperm.slane %v750, 0
    %v753 = vperm.slane %v750, 1
    %v757 = vsel %vm642, %v740, 0
    %759 = vmatpush.msra.mxu0 0.0
    %760 = vmatpush.msra.mxu0 0.0
    %761 = vmatpush.msra.mxu0 0.0
    %762 = vmatpush.msra.mxu0 0.0
    %763 = vmatpush.msra.mxu0 0.0
    %764 = vmatpush.msra.mxu0 0.0
    %765 = vmatpush.msra.mxu0 0.0
    %766 = vmatpush.msra.mxu0 0.0
    %767 = vmatpush.msra.mxu0 0.0
    %768 = vmatpush.msra.mxu0 0.0
    %769 = vmatpush.msra.mxu0 0.0
    %770 = vmatpush.msra.mxu0 0.0
    %771 = vmatpush.msra.mxu0 %v747
    %772 = vmatpush.msra.mxu0 %v745
    %773 = vmatpush.msra.mxu0 %v743
    %774 = vmatpush.msra.mxu0 %v741
    %775 = vmatmul.f32.gmra.mxu0 %v757
    %v776 = vpop.f32.mrf.mxu0
    %v777 = vadd.f32 %v752, %v776
    %778 = vdwg.mxu0
    %779 = vmatpush.msra.mxu0 0.0
    %780 = vmatpush.msra.mxu0 0.0
    %781 = vmatpush.msra.mxu0 0.0
    %782 = vmatpush.msra.mxu0 0.0
    %783 = vmatpush.msra.mxu0 0.0
    %784 = vmatpush.msra.mxu0 0.0
    %785 = vmatpush.msra.mxu0 0.0
    %786 = vmatpush.msra.mxu0 0.0
    %787 = vmatpush.msra.mxu0 0.0
    %788 = vmatpush.msra.mxu0 0.0
    %789 = vmatpush.msra.mxu0 0.0
    %790 = vmatpush.msra.mxu0 0.0
    %791 = vmatpush.msra.mxu0 %v748
    %792 = vmatpush.msra.mxu0 %v746
    %793 = vmatpush.msra.mxu0 %v744
    %794 = vmatpush.msra.mxu0 %v742
    %795 = vmatmul.f32.gmra.mxu0 %v757
    %v796 = vpop.f32.mrf.mxu0
    %v797 = vadd.f32 %v753, %v796
    %798 = vdwg.mxu0
    %v799 = vtanh.pop %v777
    %vm800 = vcmp.ge.s32.totalorder %v36, 2
    %vm801 = vcmp.lt.s32.totalorder %v36, 5
    %vm802 = vmand %vm800, %vm801
    %v803 = vsub.f32 %v701, %v797
    %v804 = vsub.f32 0.0, %v799
    %v805 = vmul.f32 %v804, 1.442695
    %v806 = vpow.pop %v805
    %v807 = vmul.f32 %v803, %v806
    %v808 = vsel %vm802, %v807, %v701
    %v809 = vld [vmem:[%s1 + $0x118] sm:$0x1]
    %v810 = vperm.slane %v809, 0
    %v811 = vsub.f32 %v808, %v810
    %v812 = vld [vmem:[%s1 + $0x110] sm:$0x1]
    %v813 = vperm.slane %v812, 0
    %v814 = vmul.f32 %v811, %v813
    %v815 = vld [vmem:[%s1 + $0x90] sm:$0xff]
    %v816 = vld [vmem:[%s1 + $0x98] sm:$0xff]
    %v817 = vld [vmem:[%s1 + $0xa0] sm:$0xff]
    %v818 = vld [vmem:[%s1 + $0xa8] sm:$0xff]
    %v819 = vld [vmem:[%s1 + $0xb0] sm:$0xff]
    %v820 = vld [vmem:[%s1 + $0xb8] sm:$0xff]
    %v821 = vld [vmem:[%s1 + $0xc0] sm:$0xff]
    %v822 = vld [vmem:[%s1 + $0xc8] sm:$0xff]
    %v823 = vld [vmem:[%s1 + $0xd0] sm:$0xff]
    %v824 = vld [vmem:[%s1 + $0xd8] sm:$0xff]
    %v825 = vld [vmem:[%s1 + $0xe0] sm:$0xff]
    %v826 = vld [vmem:[%s1 + $0xe8] sm:$0xff]
    %v827 = vld [vmem:[%s1 + $0xf0] sm:$0xff]
    %v828 = vld [vmem:[%s1 + $0xf8] sm:$0xff]
    %v829 = vld [vmem:[%s1 + $0x100] sm:$0xff]
    %v830 = vld [vmem:[%s1 + $0x108] sm:$0xff]
    %831 = vmatpush.msra.mxu0 %v830
    %832 = vmatpush.msra.mxu0 %v829
    %833 = vmatpush.msra.mxu0 %v828
    %834 = vmatpush.msra.mxu0 %v827
    %835 = vmatpush.msra.mxu0 %v826
    %836 = vmatpush.msra.mxu0 %v825
    %837 = vmatpush.msra.mxu0 %v824
    %838 = vmatpush.msra.mxu0 %v823
    %839 = vmatpush.msra.mxu0 %v822
    %840 = vmatpush.msra.mxu0 %v821
    %841 = vmatpush.msra.mxu0 %v820
    %842 = vmatpush.msra.mxu0 %v819
    %843 = vmatpush.msra.mxu0 %v818
    %844 = vmatpush.msra.mxu0 %v817
    %845 = vmatpush.msra.mxu0 %v816
    %846 = vmatpush.msra.mxu0 %v815
    %847 = vmatmul.f32.gmra.mxu0 %v814
    %v848 = vpop.f32.mrf.mxu0
    %v849 = vadd.f32 0.0, %v848
    %850 = vdwg.mxu0
    %v851 = vsel %vm801, %v849, 0.0
    %852 = vadd.xlane.f32.xlu0 %v851
    %v853 = vpop.xlane.xlu0 %852
    %v854 = vrcp.pop 5.0
    %v855 = vmul.f32 5.0, %v854
    %v856 = vsub.f32 1.0, %v855
    %v857 = vmul.f32 %v854, %v856
    %v858 = vadd.f32 %v854, %v857
    %vm859 = vweird.f32 %v854
    %v860 = vsel %vm859, %v854, %v858
    %v861 = vmul.f32 %v853, %v860
    %v862 = vsub.f32 %v849, %v861
    %v863 = vsel %vm801, %v862, 0.0
    %v864 = vmul.f32 %v863, %v863
    %865 = vadd.xlane.f32.xlu0 %v864
    %v866 = vpop.xlane.xlu0 %865
    %v867 = vmul.f32 %v866, %v557
    %v868 = vrsqrt.pop %v867
    %v869 = vmul.f32 %v868, %v867
    %v870 = vmul.f32 %v869, %v868
    %v871 = vmul.f32 0.5, %v870
    %v872 = vsub.f32 1.5, %v871
    %v873 = vmul.f32 %v868, %v872
    %v874 = vmul.f32 %v867, %v873
    %vm875 = vcmp.eq.f32.partialorder %v867, inf
    %v876 = vsel %vm875, %v867, %v874
    %vm877 = vcmp.eq.f32.partialorder %v867, 0.0
    %v878 = vand.u32 %v867, 2147483648
    %v879 = vsel %vm877, %v878, %v876
    %vm880 = vcmp.eq.s32.totalorder %v36, 5
    %v881 = vmul.f32 %v879, %v849
    %v882 = vadd.f32 %v881, %v861
    %v883 = vsel %vm880, %v882, %v849
    %v884 = vld [vmem:[%s2 + $0x88] sm:$0xff]
    %v885 = vld [vmem:[%s2 + $0x90] sm:$0xff]
    %v886 = vld [vmem:[%s2 + $0x98] sm:$0xff]
    %v887 = vld [vmem:[%s2 + $0xa0] sm:$0xff]
    %v888 = vld [vmem:[%s2 + $0xa8] sm:$0xff]
    %v889 = vld [vmem:[%s2 + $0xb0] sm:$0xff]
    %v890 = vld [vmem:[%s2 + $0xb8] sm:$0xff]
    %v891 = vld [vmem:[%s2 + $0xc0] sm:$0xff]
    %v892 = vld [vmem:[%s2 + $0xc8] sm:$0xff]
    %v893 = vld [vmem:[%s2 + $0xd0] sm:$0xff]
    %v894 = vld [vmem:[%s2 + $0xd8] sm:$0xff]
    %v895 = vld [vmem:[%s2 + $0xe0] sm:$0xff]
    %v896 = vld [vmem:[%s2 + $0xe8] sm:$0xff]
    %v897 = vld [vmem:[%s2 + $0xf0] sm:$0xff]
    %v898 = vld [vmem:[%s2 + $0xf8] sm:$0xff]
    %v899 = vld [vmem:[%s2 + $0x100] sm:$0xff]
    %v900 = vld [vmem:[%s2 + $0x108] sm:$0x1]
    %v901 = vperm.slane %v900, 0
    %902 = vmatpush.msra.mxu0 %v899
    %903 = vmatpush.msra.mxu0 %v898
    %904 = vmatpush.msra.mxu0 %v897
    %905 = vmatpush.msra.mxu0 %v896
    %906 = vmatpush.msra.mxu0 %v895
    %907 = vmatpush.msra.mxu0 %v894
    %908 = vmatpush.msra.mxu0 %v893
    %909 = vmatpush.msra.mxu0 %v892
    %910 = vmatpush.msra.mxu0 %v891
    %911 = vmatpush.msra.mxu0 %v890
    %912 = vmatpush.msra.mxu0 %v889
    %913 = vmatpush.msra.mxu0 %v888
    %914 = vmatpush.msra.mxu0 %v887
    %915 = vmatpush.msra.mxu0 %v886
    %916 = vmatpush.msra.mxu0 %v885
    %917 = vmatpush.msra.mxu0 %v884
    %918 = vmatmul.f32.gmra.mxu0 %v883
    %v919 = vpop.f32.mrf.mxu0
    %v920 = vadd.f32 %v901, %v919
    %921 = vdwg.mxu0
    %v922 = vtanh.pop %v920
    %v923 = vld [vmem:[#allocation2 + $0x50] sm:$0xff]
    %v924 = vld [vmem:[#allocation2 + $0x58] sm:$0xff]
    %v925 = vld [vmem:[#allocation2 + $0x60] sm:$0xff]
    %v926 = vld [vmem:[#allocation2 + $0x68] sm:$0xff]
    %v927 = vld [vmem:[#allocation2 + $0x70] sm:$0xff]
    %v928 = vld [vmem:[#allocation2 + $0x78] sm:$0xff]
    %v929 = vld [vmem:[#allocation2 + $0x80] sm:$0xff]
    %v930 = vld [vmem:[#allocation2 + $0x88] sm:$0xff]
    %s931 = scalar_lea.vmem [#allocation2], 144
    %v932 = vld [vmem:[%s931] ss:$8 sm:$0x3]
    %v934 = vperm.slane %v932, 0
    %v935 = vperm.slane %v932, 1
    %v939 = vsel %vm642, %v922, 0
    %941 = vmatpush.msra.mxu0 0.0
    %942 = vmatpush.msra.mxu0 0.0
    %943 = vmatpush.msra.mxu0 0.0
    %944 = vmatpush.msra.mxu0 0.0
    %945 = vmatpush.msra.mxu0 0.0
    %946 = vmatpush.msra.mxu0 0.0
    %947 = vmatpush.msra.mxu0 0.0
    %948 = vmatpush.msra.mxu0 0.0
    %949 = vmatpush.msra.mxu0 0.0
    %950 = vmatpush.msra.mxu0 0.0
    %951 = vmatpush.msra.mxu0 0.0
    %952 = vmatpush.msra.mxu0 0.0
    %953 = vmatpush.msra.mxu0 %v929
    %954 = vmatpush.msra.mxu0 %v927
    %955 = vmatpush.msra.mxu0 %v925
    %956 = vmatpush.msra.mxu0 %v923
    %957 = vmatmul.f32.gmra.mxu0 %v939
    %v958 = vpop.f32.mrf.mxu0
    %v959 = vadd.f32 %v934, %v958
    %960 = vdwg.mxu0
    %961 = vmatpush.msra.mxu0 0.0
    %962 = vmatpush.msra.mxu0 0.0
    %963 = vmatpush.msra.mxu0 0.0
    %964 = vmatpush.msra.mxu0 0.0
    %965 = vmatpush.msra.mxu0 0.0
    %966 = vmatpush.msra.mxu0 0.0
    %967 = vmatpush.msra.mxu0 0.0
    %968 = vmatpush.msra.mxu0 0.0
    %969 = vmatpush.msra.mxu0 0.0
    %970 = vmatpush.msra.mxu0 0.0
    %971 = vmatpush.msra.mxu0 0.0
    %972 = vmatpush.msra.mxu0 0.0
    %973 = vmatpush.msra.mxu0 %v930
    %974 = vmatpush.msra.mxu0 %v928
    %975 = vmatpush.msra.mxu0 %v926
    %976 = vmatpush.msra.mxu0 %v924
    %977 = vmatmul.f32.gmra.mxu0 %v939
    %v978 = vpop.f32.mrf.mxu0
    %v979 = vadd.f32 %v935, %v978
    %980 = vdwg.mxu0
    %v981 = vtanh.pop %v959
    %vm982 = vcmp.lt.s32.totalorder %v36, 3
    %vm983 = vmand %vm687, %vm982
    %v984 = vsub.f32 %v883, %v979
    %v985 = vsub.f32 0.0, %v981
    %v986 = vmul.f32 %v985, 1.442695
    %v987 = vpow.pop %v986
    %v988 = vmul.f32 %v984, %v987
    %v989 = vsel %vm983, %v988, %v883
    %v990 = vld [vmem:[%s1 + $0x89] sm:$0x1]
    %v991 = vperm.slane %v990, 0
    %v992 = vsub.f32 %v989, %v991
    %v993 = vld [vmem:[%s1 + $0x81] sm:$0x1]
    %v994 = vperm.slane %v993, 0
    %v995 = vmul.f32 %v992, %v994
    %v996 = vld [vmem:[%s2] sm:$0xff]
    %v997 = vld [vmem:[%s2 + $0x8] sm:$0xff]
    %v998 = vld [vmem:[%s2 + $0x10] sm:$0xff]
    %v999 = vld [vmem:[%s2 + $0x18] sm:$0xff]
    %v1000 = vld [vmem:[%s2 + $0x20] sm:$0xff]
    %v1001 = vld [vmem:[%s2 + $0x28] sm:$0xff]
    %v1002 = vld [vmem:[%s2 + $0x30] sm:$0xff]
    %v1003 = vld [vmem:[%s2 + $0x38] sm:$0xff]
    %v1004 = vld [vmem:[%s2 + $0x40] sm:$0xff]
    %v1005 = vld [vmem:[%s2 + $0x48] sm:$0xff]
    %v1006 = vld [vmem:[%s2 + $0x50] sm:$0xff]
    %v1007 = vld [vmem:[%s2 + $0x58] sm:$0xff]
    %v1008 = vld [vmem:[%s2 + $0x60] sm:$0xff]
    %v1009 = vld [vmem:[%s2 + $0x68] sm:$0xff]
    %v1010 = vld [vmem:[%s2 + $0x70] sm:$0xff]
    %v1011 = vld [vmem:[%s2 + $0x78] sm:$0xff]
    %v1012 = vld [vmem:[%s2 + $0x80] sm:$0x1]
    %v1013 = vperm.slane %v1012, 0
    %1014 = vmatpush.msra.mxu0 %v1011
    %1015 = vmatpush.msra.mxu0 %v1010
    %1016 = vmatpush.msra.mxu0 %v1009
    %1017 = vmatpush.msra.mxu0 %v1008
    %1018 = vmatpush.msra.mxu0 %v1007
    %1019 = vmatpush.msra.mxu0 %v1006
    %1020 = vmatpush.msra.mxu0 %v1005
    %1021 = vmatpush.msra.mxu0 %v1004
    %1022 = vmatpush.msra.mxu0 %v1003
    %1023 = vmatpush.msra.mxu0 %v1002
    %1024 = vmatpush.msra.mxu0 %v1001
    %1025 = vmatpush.msra.mxu0 %v1000
    %1026 = vmatpush.msra.mxu0 %v999
    %1027 = vmatpush.msra.mxu0 %v998
    %1028 = vmatpush.msra.mxu0 %v997
    %1029 = vmatpush.msra.mxu0 %v996
    %1030 = vmatmul.f32.gmra.mxu0 %v995
    %v1031 = vpop.f32.mrf.mxu0
    %v1032 = vadd.f32 %v1013, %v1031
    %1033 = vdwg.mxu0
    %v1034 = vtanh.pop %v1032
    %v1035 = vld [vmem:[#allocation2] sm:$0xff]
    %v1036 = vld [vmem:[#allocation2 + $0x8] sm:$0xff]
    %v1037 = vld [vmem:[#allocation2 + $0x10] sm:$0xff]
    %v1038 = vld [vmem:[#allocation2 + $0x18] sm:$0xff]
    %v1039 = vld [vmem:[#allocation2 + $0x20] sm:$0xff]
    %v1040 = vld [vmem:[#allocation2 + $0x28] sm:$0xff]
    %v1041 = vld [vmem:[#allocation2 + $0x30] sm:$0xff]
    %v1042 = vld [vmem:[#allocation2 + $0x38] sm:$0xff]
    %s1043 = scalar_lea.vmem [#allocation2], 64
    %v1044 = vld [vmem:[%s1043] ss:$8 sm:$0x3]
    %v1046 = vperm.slane %v1044, 0
    %v1047 = vperm.slane %v1044, 1
    %v1051 = vsel %vm642, %v1034, 0
    %1053 = vmatpush.msra.mxu0 0.0
    %1054 = vmatpush.msra.mxu0 0.0
    %1055 = vmatpush.msra.mxu0 0.0
    %1056 = vmatpush.msra.mxu0 0.0
    %1057 = vmatpush.msra.mxu0 0.0
    %1058 = vmatpush.msra.mxu0 0.0
    %1059 = vmatpush.msra.mxu0 0.0
    %1060 = vmatpush.msra.mxu0 0.0
    %1061 = vmatpush.msra.mxu0 0.0
    %1062 = vmatpush.msra.mxu0 0.0
    %1063 = vmatpush.msra.mxu0 0.0
    %1064 = vmatpush.msra.mxu0 0.0
    %1065 = vmatpush.msra.mxu0 %v1041
    %1066 = vmatpush.msra.mxu0 %v1039
    %1067 = vmatpush.msra.mxu0 %v1037
    %1068 = vmatpush.msra.mxu0 %v1035
    %1069 = vmatmul.f32.gmra.mxu0 %v1051
    %v1070 = vpop.f32.mrf.mxu0
    %v1071 = vadd.f32 %v1046, %v1070
    %1072 = vdwg.mxu0
    %1073 = vmatpush.msra.mxu0 0.0
    %1074 = vmatpush.msra.mxu0 0.0
    %1075 = vmatpush.msra.mxu0 0.0
    %1076 = vmatpush.msra.mxu0 0.0
    %1077 = vmatpush.msra.mxu0 0.0
    %1078 = vmatpush.msra.mxu0 0.0
    %1079 = vmatpush.msra.mxu0 0.0
    %1080 = vmatpush.msra.mxu0 0.0
    %1081 = vmatpush.msra.mxu0 0.0
    %1082 = vmatpush.msra.mxu0 0.0
    %1083 = vmatpush.msra.mxu0 0.0
    %1084 = vmatpush.msra.mxu0 0.0
    %1085 = vmatpush.msra.mxu0 %v1042
    %1086 = vmatpush.msra.mxu0 %v1040
    %1087 = vmatpush.msra.mxu0 %v1038
    %1088 = vmatpush.msra.mxu0 %v1036
    %1089 = vmatmul.f32.gmra.mxu0 %v1051
    %v1090 = vpop.f32.mrf.mxu0
    %v1091 = vadd.f32 %v1047, %v1090
    %1092 = vdwg.mxu0
    %v1093 = vtanh.pop %v1071
    %vm1094 = vcmp.ge.s32.totalorder %v36, 3
    %vm1095 = vcmp.lt.s32.totalorder %v36, 6
    %vm1096 = vmand %vm1094, %vm1095
    %v1097 = vsub.f32 %v995, %v1091
    %v1098 = vsub.f32 0.0, %v1093
    %v1099 = vmul.f32 %v1098, 1.442695
    %v1100 = vpow.pop %v1099
    %v1101 = vmul.f32 %v1097, %v1100
    %v1102 = vsel %vm1096, %v1101, %v995
    %v1103 = vld [vmem:[%s1 + $0x88] sm:$0x1]
    %v1104 = vperm.slane %v1103, 0
    %v1105 = vsub.f32 %v1102, %v1104
    %v1106 = vld [vmem:[%s1 + $0x80] sm:$0x1]
    %v1107 = vperm.slane %v1106, 0
    %v1108 = vmul.f32 %v1105, %v1107
    %v1109 = vld [vmem:[%s1] sm:$0xff]
    %v1110 = vld [vmem:[%s1 + $0x8] sm:$0xff]
    %v1111 = vld [vmem:[%s1 + $0x10] sm:$0xff]
    %v1112 = vld [vmem:[%s1 + $0x18] sm:$0xff]
    %v1113 = vld [vmem:[%s1 + $0x20] sm:$0xff]
    %v1114 = vld [vmem:[%s1 + $0x28] sm:$0xff]
    %v1115 = vld [vmem:[%s1 + $0x30] sm:$0xff]
    %v1116 = vld [vmem:[%s1 + $0x38] sm:$0xff]
    %v1117 = vld [vmem:[%s1 + $0x40] sm:$0xff]
    %v1118 = vld [vmem:[%s1 + $0x48] sm:$0xff]
    %v1119 = vld [vmem:[%s1 + $0x50] sm:$0xff]
    %v1120 = vld [vmem:[%s1 + $0x58] sm:$0xff]
    %v1121 = vld [vmem:[%s1 + $0x60] sm:$0xff]
    %v1122 = vld [vmem:[%s1 + $0x68] sm:$0xff]
    %v1123 = vld [vmem:[%s1 + $0x70] sm:$0xff]
    %v1124 = vld [vmem:[%s1 + $0x78] sm:$0xff]
    %1125 = vmatpush.msra.mxu0 %v1124
    %1126 = vmatpush.msra.mxu0 %v1123
    %1127 = vmatpush.msra.mxu0 %v1122
    %1128 = vmatpush.msra.mxu0 %v1121
    %1129 = vmatpush.msra.mxu0 %v1120
    %1130 = vmatpush.msra.mxu0 %v1119
    %1131 = vmatpush.msra.mxu0 %v1118
    %1132 = vmatpush.msra.mxu0 %v1117
    %1133 = vmatpush.msra.mxu0 %v1116
    %1134 = vmatpush.msra.mxu0 %v1115
    %1135 = vmatpush.msra.mxu0 %v1114
    %1136 = vmatpush.msra.mxu0 %v1113
    %1137 = vmatpush.msra.mxu0 %v1112
    %1138 = vmatpush.msra.mxu0 %v1111
    %1139 = vmatpush.msra.mxu0 %v1110
    %1140 = vmatpush.msra.mxu0 %v1109
    %1141 = vmatmul.f32.gmra.mxu0 %v1108
    %v1142 = vpop.f32.mrf.mxu0
    %v1143 = vadd.f32 0.0, %v1142
    %1144 = vdwg.mxu0
    %1145 = vst [vmem:[#allocation5] sm:$0xff] %v1143
    // Predicated region
    $region22: #{tpu_custom_call.1} parent=1 // pred_check
      _
    $region23: #{tpu_custom_call.1} parent=1 // pred_check_branch
      %1147 = sbr.rel (0) target = $region25
    $region24: #{tpu_custom_call.1} parent=1 // pred_region
      %1149 = vsyncadd [#allocation4], 0
      %s1151 = sshll.u32 [#allocation5], 4
      %s1152 = int_to_ptr.vmem [resolvable:$true] %s1151
      %s1153 = sshll.u32 %s4, 4
      %s1154 = int_to_ptr.hbm [resolvable:$true] %s1153
      %1156 = dma.vmem_to_hbm [thread:$0]  %s1152, 128, %s1154, [#allocation4]
    $region25: #{tpu_custom_call.1} parent=1 // pred_fallthru
      _
    // Predicated region
    $region26: #{tpu_custom_call.1} parent=1 // pred_check
      _
    $region27: #{tpu_custom_call.1} parent=1 // pred_check_branch
      %1158 = sbr.rel (0) target = $region29
    $region28: #{tpu_custom_call.1} parent=1 // pred_region
      %1160 = dma.done [#allocation4], 128
    $region29: #{tpu_custom_call.1} parent=1 // pred_fallthru
      _
    %1161 = vsyncpa [#allocation3], 1
    %1162 = vsyncpa [#allocation4], 1

</llo_original>
